<compile_context>
chip_gen: v7x
topology: tpu7x:2x2x1
jax: 0.10.0
libtpu: 0.0.40
codegen_flags: <defaults>
</compile_context>

<pallas_src>
import functools

import jax
import jax.numpy as jnp
from jax.experimental import pallas as pl
from jax.experimental.pallas import tpu as pltpu

Z_DIM = 20
HIDDEN_DIM = 400
OUTPUT_DIM = 28 * 28   # 784

_TARGET_TB = 512       # ~85% of HBM roofline per the measured tiling sweep


def decoder_kernel(z_ref, w1_ref, b1_ref, w2_ref, b2_ref, out_ref):
    # fc1 + ReLU.  bf16 x bf16 on the MXU, f32 accumulate, f32 bias/ReLU on VPU.
    z = z_ref[...].astype(jnp.bfloat16)
    h = jnp.dot(z, w1_ref[...], preferred_element_type=jnp.float32)
    h = jnp.maximum(h + b1_ref[...], 0.0)

    # fc2 + sigmoid.  exp and the approx reciprocal both go to the EUP slot
    # (which has slack), so the VALU never becomes the binding unit.
    logits = jnp.dot(h.astype(jnp.bfloat16), w2_ref[...],
                     preferred_element_type=jnp.float32)
    logits = logits + b2_ref[...]
    x_recon = pl.reciprocal(1.0 + jnp.exp(-logits), approx=True)
    out_ref[...] = x_recon.astype(out_ref.dtype)


def prepare_params(params):
    """One-time weight prep: transpose to (in, out) and cast to bf16."""
    return {
        "w1": params["fc1_w"].T.astype(jnp.bfloat16),        # (Z, H)
        "b1": params["fc1_b"].reshape(1, -1).astype(jnp.float32),
        "w2": params["fc2_w"].T.astype(jnp.bfloat16),        # (H, O)
        "b2": params["fc2_b"].reshape(1, -1).astype(jnp.float32),
    }


def _round_up(x, m):
    return ((x + m - 1) // m) * m


def _tiling(B):
    """Fixed-target batch tiling: TB ~ 512, grid = cdiv, wrapper pads the tail.

    512 <= B < 1024 -> two tiles so both v7x TensorCores get a 'parallel' step;
    tiny batches use a single sublane-aligned tile.
    """
    Bp = _round_up(B, 8)                           # sublane alignment
    if Bp >= 2 * _TARGET_TB:
        TB = _TARGET_TB
    elif Bp >= _TARGET_TB:
        TB = _round_up(pl.cdiv(Bp, 2), 8)          # >= 2 grid steps for v7x
    else:
        TB = Bp                                    # single small tile
    B_pad = _round_up(Bp, TB)
    return TB, B_pad


_SINGLE_BUFFER_OK = None


def _stationary_single_buffered():
    """Probe (once) whether pipeline_mode=pl.Buffered(1) is supported.

    Stationary operands never change block, so a single buffer frees ~0.8 MiB
    of VMEM (mostly the second W2 copy).  Fall back to default double
    buffering if this JAX/Mosaic build rejects it.
    """
    global _SINGLE_BUFFER_OK
    if _SINGLE_BUFFER_OK is None:
        def probe(x_ref, o_ref):
            o_ref[...] = x_ref[...] + 1.0
        try:
            f = pl.pallas_call(
                probe,
                out_shape=jax.ShapeDtypeStruct((16, 128), jnp.float32),
                grid=(2,),
                in_specs=[pl.BlockSpec((8, 128), lambda i: (0, 0),
                                       pipeline_mode=pl.Buffered(1))],
                out_specs=pl.BlockSpec((8, 128), lambda i: (i, 0)),
            )
            jax.block_until_ready(f(jnp.zeros((8, 128), jnp.float32)))
            _SINGLE_BUFFER_OK = True
        except Exception:
            _SINGLE_BUFFER_OK = False
    return _SINGLE_BUFFER_OK


def _stationary_spec(shape, single_buffer):
    if single_buffer:
        return pl.BlockSpec(shape, lambda i: (0, 0), pipeline_mode=pl.Buffered(1))
    return pl.BlockSpec(shape, lambda i: (0, 0))


@functools.partial(jax.jit, static_argnums=(2, 3))
def _decoder_forward(z, prep, out_dtype, single_buffer):
    B, Z = z.shape
    H = prep["w1"].shape[1]
    O = prep["w2"].shape[1]

    TB, B_pad = _tiling(B)
    if B_pad != B:
        z = jnp.pad(z, ((0, B_pad - B), (0, 0)))   # zero rows; sliced off below
    grid = (B_pad // TB,)

    out = pl.pallas_call(
        decoder_kernel,
        out_shape=jax.ShapeDtypeStruct((B_pad, O), out_dtype),
        grid=grid,
        in_specs=[
            pl.BlockSpec((TB, Z), lambda i: (i, 0)),     # z: tiled over batch
            _stationary_spec((Z, H), single_buffer),     # W1 (weight-stationary)
            _stationary_spec((1, H), single_buffer),     # b1
            _stationary_spec((H, O), single_buffer),     # W2 (weight-stationary)
            _stationary_spec((1, O), single_buffer),     # b2
        ],
        out_specs=pl.BlockSpec((TB, O), lambda i: (i, 0)),
        compiler_params=pltpu.CompilerParams(
            dimension_semantics=("parallel",),
            vmem_limit_bytes=16 << 20,   # TB=512 working set (double-buffered) ~6 MiB
        ),
    )(z, prep["w1"], prep["b1"], prep["w2"], prep["b2"])

    return out[:B] if B_pad != B else out


def decoder_forward(z, prep, out_dtype=jnp.float32):
    """z: (B, z_dim) float32.  prep: output of prepare_params().

    out_dtype=jnp.bfloat16 halves the dominant (B, 784) HBM writeback at large
    batch, if the downstream consumer (e.g. BCE loss) tolerates bf16.
    """
    return _decoder_forward(z, prep, out_dtype, _stationary_single_buffered())


def init_params(key):
    """Deterministic init mirroring nn.Linear's default U(-1/sqrt(fan_in), +1/sqrt(fan_in))."""
    ks = jax.random.split(key, 4)

    def linear(kw, kb, fan_in, fan_out):
        bound = 1.0 / jnp.sqrt(fan_in)
        w = jax.random.uniform(kw, (fan_out, fan_in), jnp.float32, -bound, bound)
        b = jax.random.uniform(kb, (fan_out,), jnp.float32, -bound, bound)
        return w, b

    fc1_w, fc1_b = linear(ks[0], ks[1], Z_DIM, HIDDEN_DIM)
    fc2_w, fc2_b = linear(ks[2], ks[3], HIDDEN_DIM, OUTPUT_DIM)
    return {"fc1_w": fc1_w, "fc1_b": fc1_b, "fc2_w": fc2_w, "fc2_b": fc2_b}


def decoder_ref_f32(z, params):
    """Pure-f32 reference matching the PyTorch module exactly."""
    h = jnp.maximum(z @ params["fc1_w"].T + params["fc1_b"], 0.0)
    return jax.nn.sigmoid(h @ params["fc2_w"].T + params["fc2_b"])


def decoder_ref_prepared(z, prep):
    """Reference using the same bf16-quantized weights / inter-layer cast as the kernel."""
    zb = z.astype(jnp.bfloat16).astype(jnp.float32)
    w1 = prep["w1"].astype(jnp.float32)
    h = jnp.maximum(zb @ w1 + prep["b1"], 0.0)
    hb = h.astype(jnp.bfloat16).astype(jnp.float32)
    w2 = prep["w2"].astype(jnp.float32)
    return jax.nn.sigmoid(hb @ w2 + prep["b2"])


if __name__ == "__main__":
    key = jax.random.PRNGKey(0)
    k_param, k_z = jax.random.split(key)
    params = init_params(k_param)
    prep = prepare_params(params)   # one-time weight transpose + bf16 cast

    B = 8
    z = jax.random.normal(k_z, (B, Z_DIM), jnp.float32)

    x_recon = jax.block_until_ready(decoder_forward(z, prep))
    assert x_recon.shape == (B, OUTPUT_DIM)
    assert x_recon.dtype == jnp.float32

    # Tight check against a reference using the same bf16-quantized weights.
    ref_q = decoder_ref_prepared(z, prep)
    assert jnp.allclose(x_recon, ref_q, atol=2e-3, rtol=2e-3)

    # Looser sanity check against the exact f32 PyTorch-equivalent math.
    ref_f32 = decoder_ref_f32(z, params)
    assert jnp.allclose(x_recon, ref_f32, atol=2e-2)

    # Exercise the cdiv + tail-padding path (B not a multiple of 8).
    B2 = 13
    z2 = jax.random.normal(k_z, (B2, Z_DIM), jnp.float32)
    x2 = jax.block_until_ready(decoder_forward(z2, prep))
    assert x2.shape == (B2, OUTPUT_DIM)
    assert jnp.allclose(x2, decoder_ref_prepared(z2, prep), atol=2e-3, rtol=2e-3)

    # Optional bf16 output path (halves the dominant HBM writeback at large B).
    x_bf16 = jax.block_until_ready(decoder_forward(z, prep, out_dtype=jnp.bfloat16))
    assert x_bf16.dtype == jnp.bfloat16
    assert jnp.allclose(x_bf16.astype(jnp.float32), ref_q, atol=1e-2)

    print("KERNEL_OK")
</pallas_src>

<mosaic_0001>
module attributes {stable_mosaic.version = 11 : i64} {
  func.func @probe(%arg0: i32, %arg1: memref<8x128xf32, #tpu.memory_space<vmem>>, %arg2: memref<8x128xf32, #tpu.memory_space<vmem>>) attributes {dimension_semantics = [#tpu.dimension_semantics<arbitrary>], iteration_bounds = array<i64: 2>, scalar_prefetch = 0 : i64, scratch_operands = 0 : i64, tpu.core_type = #tpu.core_type<tc>, window_params = [{pipeline_mode = #tpu.pipeline_mode<synchronous>, transform_indices = @transform_0, window_bounds = array<i64: 8, 128>}, {transform_indices = @transform_1, window_bounds = array<i64: 8, 128>}]} {
    %c0 = arith.constant 0 : index
    %c0_0 = arith.constant 0 : index
    %0 = vector.load %arg1[%c0, %c0_0] : memref<8x128xf32, #tpu.memory_space<vmem>>, vector<8x128xf32>
    %cst = arith.constant 1.000000e+00 : f32
    %1 = vector.broadcast %cst : f32 to vector<8x128xf32>
    %2 = arith.addf %0, %1 : vector<8x128xf32>
    %c0_1 = arith.constant 0 : index
    %c0_2 = arith.constant 0 : index
    %3 = vector.load %arg2[%c0_1, %c0_2] : memref<8x128xf32, #tpu.memory_space<vmem>>, vector<8x128xf32>
    tpu.vector_store %arg2[%c0_1, %c0_2], %2 {strides = array<i32>} : memref<8x128xf32, #tpu.memory_space<vmem>>, vector<8x128xf32>,
    return
  }
  func.func @transform_0(%arg0: i32) -> (i32, i32) {
    %c0_i32 = arith.constant 0 : i32
    %c0_i32_0 = arith.constant 0 : i32
    %c0_i32_1 = arith.constant 0 : i32
    return %c0_i32, %c0_i32_0 : i32, i32
  }
  func.func @transform_1(%arg0: i32) -> (i32, i32) {
    %c0_i32 = arith.constant 0 : i32
    %c0_i32_0 = arith.constant 0 : i32
    return %arg0, %c0_i32 : i32, i32
  }
}

module attributes {stable_mosaic.version = 11 : i64} {
  func.func @decoder_kernel(%arg0: i32, %arg1: memref<8x20xf32, #tpu.memory_space<vmem>>, %arg2: memref<20x400xbf16, #tpu.memory_space<vmem>>, %arg3: memref<1x400xf32, #tpu.memory_space<vmem>>, %arg4: memref<400x784xbf16, #tpu.memory_space<vmem>>, %arg5: memref<1x784xf32, #tpu.memory_space<vmem>>, %arg6: memref<8x784xf32, #tpu.memory_space<vmem>>) attributes {dimension_semantics = [#tpu.dimension_semantics<parallel>], iteration_bounds = array<i64: 1>, scalar_prefetch = 0 : i64, scratch_operands = 0 : i64, tpu.core_type = #tpu.core_type<tc>, window_params = [{transform_indices = @transform_0, window_bounds = array<i64: 8, 20>}, {pipeline_mode = #tpu.pipeline_mode<synchronous>, transform_indices = @transform_1, window_bounds = array<i64: 20, 400>}, {pipeline_mode = #tpu.pipeline_mode<synchronous>, transform_indices = @transform_2, window_bounds = array<i64: 1, 400>}, {pipeline_mode = #tpu.pipeline_mode<synchronous>, transform_indices = @transform_3, window_bounds = array<i64: 400, 784>}, {pipeline_mode = #tpu.pipeline_mode<synchronous>, transform_indices = @transform_4, window_bounds = array<i64: 1, 784>}, {transform_indices = @transform_5, window_bounds = array<i64: 8, 784>}]} {
    %c0 = arith.constant 0 : index
    %c0_0 = arith.constant 0 : index
    %0 = vector.load %arg1[%c0, %c0_0] : memref<8x20xf32, #tpu.memory_space<vmem>>, vector<8x20xf32>
    %1 = arith.truncf %0 : vector<8x20xf32> to vector<8x20xbf16>
    %c0_1 = arith.constant 0 : index
    %c0_2 = arith.constant 0 : index
    %2 = vector.load %arg2[%c0_1, %c0_2] : memref<20x400xbf16, #tpu.memory_space<vmem>>, vector<20x400xbf16>
    %cst = arith.constant dense<0.000000e+00> : vector<8x400xf32>
    %3 = tpu.matmul %1, %2, %cst {dimension_numbers = #tpu.dot_dimension_numbers<[1], [0], [0], [1], [0, 0, 1, 1], [], []>} : vector<8x20xbf16>, vector<20x400xbf16>, vector<8x400xf32> -> vector<8x400xf32>
    %c0_3 = arith.constant 0 : index
    %c0_4 = arith.constant 0 : index
    %4 = vector.load %arg3[%c0_3, %c0_4] : memref<1x400xf32, #tpu.memory_space<vmem>>, vector<1x400xf32>
    %5 = vector.broadcast %4 : vector<1x400xf32> to vector<8x400xf32>
    %6 = arith.addf %3, %5 : vector<8x400xf32>
    %cst_5 = arith.constant 0.000000e+00 : f32
    %7 = vector.broadcast %cst_5 : f32 to vector<8x400xf32>
    %8 = arith.maximumf %6, %7 : vector<8x400xf32>
    %9 = arith.truncf %8 : vector<8x400xf32> to vector<8x400xbf16>
    %c0_6 = arith.constant 0 : index
    %c0_7 = arith.constant 0 : index
    %10 = vector.load %arg4[%c0_6, %c0_7] : memref<400x784xbf16, #tpu.memory_space<vmem>>, vector<400x784xbf16>
    %cst_8 = arith.constant dense<0.000000e+00> : vector<8x784xf32>
    %11 = tpu.matmul %9, %10, %cst_8 {dimension_numbers = #tpu.dot_dimension_numbers<[1], [0], [0], [1], [0, 0, 1, 1], [], []>} : vector<8x400xbf16>, vector<400x784xbf16>, vector<8x784xf32> -> vector<8x784xf32>
    %c0_9 = arith.constant 0 : index
    %c0_10 = arith.constant 0 : index
    %12 = vector.load %arg5[%c0_9, %c0_10] : memref<1x784xf32, #tpu.memory_space<vmem>>, vector<1x784xf32>
    %13 = vector.broadcast %12 : vector<1x784xf32> to vector<8x784xf32>
    %14 = arith.addf %11, %13 : vector<8x784xf32>
    %cst_11 = arith.constant 0.000000e+00 : f32
    %15 = vector.broadcast %cst_11 : f32 to vector<8x784xf32>
    %16 = arith.subf %15, %14 : vector<8x784xf32>
    %17 = math.exp %16 : vector<8x784xf32>
    %cst_12 = arith.constant 1.000000e+00 : f32
    %18 = vector.broadcast %cst_12 : f32 to vector<8x784xf32>
    %19 = arith.addf %18, %17 : vector<8x784xf32>
    %20 = tpu.reciprocal %19 {approx = true} : vector<8x784xf32> -> vector<8x784xf32>
    %c0_13 = arith.constant 0 : index
    %c0_14 = arith.constant 0 : index
    %21 = vector.load %arg6[%c0_13, %c0_14] : memref<8x784xf32, #tpu.memory_space<vmem>>, vector<8x784xf32>
    tpu.vector_store %arg6[%c0_13, %c0_14], %20 {strides = array<i32>} : memref<8x784xf32, #tpu.memory_space<vmem>>, vector<8x784xf32>,
    return
  }
  func.func @transform_0(%arg0: i32) -> (i32, i32) {
    %c0_i32 = arith.constant 0 : i32
    %c0_i32_0 = arith.constant 0 : i32
    return %arg0, %c0_i32 : i32, i32
  }
  func.func @transform_1(%arg0: i32) -> (i32, i32) {
    %c0_i32 = arith.constant 0 : i32
    %c0_i32_0 = arith.constant 0 : i32
    %c0_i32_1 = arith.constant 0 : i32
    return %c0_i32, %c0_i32_0 : i32, i32
  }
  func.func @transform_2(%arg0: i32) -> (i32, i32) {
    %c0_i32 = arith.constant 0 : i32
    %c0_i32_0 = arith.constant 0 : i32
    %c0_i32_1 = arith.constant 0 : i32
    return %c0_i32, %c0_i32_0 : i32, i32
  }
  func.func @transform_3(%arg0: i32) -> (i32, i32) {
    %c0_i32 = arith.constant 0 : i32
    %c0_i32_0 = arith.constant 0 : i32
    %c0_i32_1 = arith.constant 0 : i32
    return %c0_i32, %c0_i32_0 : i32, i32
  }
  func.func @transform_4(%arg0: i32) -> (i32, i32) {
    %c0_i32 = arith.constant 0 : i32
    %c0_i32_0 = arith.constant 0 : i32
    %c0_i32_1 = arith.constant 0 : i32
    return %c0_i32, %c0_i32_0 : i32, i32
  }
  func.func @transform_5(%arg0: i32) -> (i32, i32) {
    %c0_i32 = arith.constant 0 : i32
    %c0_i32_0 = arith.constant 0 : i32
    return %arg0, %c0_i32 : i32, i32
  }
}

</mosaic_0001>

<llo_original>
// kernel: tpu_custom_call.1
$region0: #{tpu_custom_call.1}
  #allocation0 [shape = 'u32[]', space=smem, size = 0x4, offset = 0x4, fixed_abs, tag = 'smem constant byte address 0x4 - core index']
  #allocation1 [shape = 'u32[144,128]{1,0:T(1,128)}', space=vmem, size = 0x12000, scoped, tag = 'internal scratch']
  %s0 = inlined_call_operand.hbm [shape: f32[8,128], index: 0, kind: input, shape index: {}]
  %s1 = inlined_call_operand.hbm [shape: f32[16,128], index: 1, kind: output, shape index: {}]
  %s2 = sld [smem:[#allocation0]]
  $region41: #{tpu_custom_call.1} parent=0
    _
  %s4 = ssub.s32 1, %s2
  %s5 = scalar_select 0, %s4, %s2
  $region1: #{tpu_custom_call.1} parent=0
    #allocation2 [shape = 'u8[4096]{0}', space=vmem, size = 0x1000, scoped, tag = 'input window, operand 0, single buffered']
    #allocation3 [shape = 's32[2]{0}', space=sflag, size = 0x8, scoped, tag = 'scoped memory for tpu_custom_call.1']
    #allocation4 [shape = 's32[2]{0}', space=sflag, size = 0x8, scoped, tag = 'scoped memory for tpu_custom_call.1']
    #allocation5 [shape = 'u8[8192]{0}', space=vmem, size = 0x2000, scoped, tag = 'output window, operand 0']
    %6 = vsyncpa [#allocation3], 0
    %7 = vsyncpa [#allocation4], 0
    %s8 = scalar_lea.sflag [#allocation4], 1
    %9 = vsyncpa %s8, 0
    loop: start=0, step=1, limit=4
    $region2: #{tpu_custom_call.1} parent=1 // loop_pre_header
      _
    $region3: #{tpu_custom_call.1} parent=1 // loop_header
      %s11 = sphi 0, %s15
      %p12 = scmp.ge.s32.totalorder %s11, 4
      %s19 = sphi 0, %s19
      %s21 = sphi 0, %s19
      %s22 = sphi 0, %s21
      %s36 = sphi 0, %s22
      %s42 = sphi 0, %s44
      %s45 = sphi 0, %s42
      %s46 = sphi 0, %s45
      %s62 = sphi 0, %s46
    $region4: #{tpu_custom_call.1} parent=1 // loop_header_branch
      %14 = sbr.rel (%p12) target = $region8
    $region5: #{tpu_custom_call.1} parent=1 // loop_body
      %s16 = ssub.s32 %s11, 1
      %s17 = ssub.s32 %s11, 2
      %s18 = sadd.s32 %s11, 1
      %s20 = sadd.s32 %s19, 1
      %p23 = scmp.eq.s32.totalorder %s11, 1
      %p24 = scmp.ne.s32.totalorder %s19, %s21
      %p25 = scmp.eq.s32.totalorder %s11, 0
      %p26 = por %p24, %p25
      %p27 = scmp.ne.s32.totalorder %s19, %s21
      %p28 = scmp.eq.s32.totalorder %s16, 1
      %p29 = por %p27, %p28
      %p30 = scmp.ne.s32.totalorder %s21, %s22
      %p31 = scmp.eq.s32.totalorder %s16, 0
      %p32 = por %p30, %p31
      %p33 = scmp.ne.s32.totalorder %s21, %s22
      %p34 = scmp.eq.s32.totalorder %s17, 1
      %p35 = por %p33, %p34
      %p37 = scmp.ne.s32.totalorder %s22, %s36
      %p38 = scmp.eq.s32.totalorder %s17, 0
      %p39 = por %p37, %p38
      %s40 = ssub.s32 %s11, %s18
      %p41 = scmp.eq.s32.totalorder %s40, 0
      %s43 = sadd.s32 %s42, 1
      %s44 = scalar_select %p41, %s42, %s43
      %p47 = pneg %p41
      %p48 = scmp.eq.s32.totalorder %s11, 1
      %p49 = por %p47, %p48
      %p50 = scmp.ne.s32.totalorder %s42, %s45
      %p51 = scmp.eq.s32.totalorder %s11, 0
      %p52 = por %p50, %p51
      %p53 = scmp.ne.s32.totalorder %s42, %s45
      %p54 = scmp.eq.s32.totalorder %s16, 1
      %p55 = por %p53, %p54
      %p56 = scmp.ne.s32.totalorder %s45, %s46
      %p57 = scmp.eq.s32.totalorder %s16, 0
      %p58 = por %p56, %p57
      %p59 = scmp.ne.s32.totalorder %s45, %s46
      %p60 = scmp.eq.s32.totalorder %s17, 1
      %p61 = por %p59, %p60
      %p63 = scmp.ne.s32.totalorder %s46, %s62
      %p64 = scmp.eq.s32.totalorder %s17, 0
      %p65 = por %p63, %p64
      %p66 = scmp.le.s32.totalorder 1, %s11
      %p67 = scmp.lt.s32.totalorder %s11, 3
      %p68 = pnand %p66, %p67
      %p69 = pneg %p68
      // Predicated region
      $region9: #{tpu_custom_call.1} parent=5 // pred_check
        _
      $region10: #{tpu_custom_call.1} parent=5 // pred_check_branch
        %71 = sbr.rel (%p68) target = $region12
      $region11: #{tpu_custom_call.1} parent=5 // pred_region
        %s72 = ssub.s32 %s11, 1
        // Predicated region
        $region13: #{tpu_custom_call.1} parent=11 // pred_check
          %p73 = pneg %p32
        $region14: #{tpu_custom_call.1} parent=11 // pred_check_branch
          %75 = sbr.rel (%p73) target = $region16
        $region15: #{tpu_custom_call.1} parent=11 // pred_region
          %s77 = ssub.s32 128, 128
          %78 = vsyncadd [#allocation3], %s77
          %s80 = sshll.u32 [#allocation2], 4
          %s81 = int_to_ptr.vmem [resolvable:$true] %s80
          %83 = dma.hbm_to_vmem [thread:$0]  %s0, 128, %s81, [#allocation3]
        $region16: #{tpu_custom_call.1} parent=11 // pred_fallthru
          _
      $region12: #{tpu_custom_call.1} parent=5 // pred_fallthru
        _
      %p84 = scmp.lt.s32.totalorder %s11, 2
      // Predicated region
      $region17: #{tpu_custom_call.1} parent=5 // pred_check
        %p85 = pneg %p84
      $region18: #{tpu_custom_call.1} parent=5 // pred_check_branch
        %87 = sbr.rel (%p85) target = $region20
      $region19: #{tpu_custom_call.1} parent=5 // pred_region
        _
      $region20: #{tpu_custom_call.1} parent=5 // pred_fallthru
        _
      %p88 = scmp.le.s32.totalorder 1, %s11
      %p89 = scmp.lt.s32.totalorder %s11, 3
      %p90 = pnand %p88, %p89
      %p91 = pneg %p90
      // Predicated region
      $region21: #{tpu_custom_call.1} parent=5 // pred_check
        _
      $region22: #{tpu_custom_call.1} parent=5 // pred_check_branch
        %93 = sbr.rel (%p90) target = $region24
      $region23: #{tpu_custom_call.1} parent=5 // pred_region
        %s94 = ssub.s32 %s11, 1
        // Predicated region
        $region25: #{tpu_custom_call.1} parent=23 // pred_check
          %p95 = pneg %p32
        $region26: #{tpu_custom_call.1} parent=23 // pred_check_branch
          %97 = sbr.rel (%p95) target = $region28
        $region27: #{tpu_custom_call.1} parent=23 // pred_region
          %98 = dma.done [#allocation3], 128
        $region28: #{tpu_custom_call.1} parent=23 // pred_fallthru
          _
        %p99 = pneg %p32
        %p100 = pneg %p29
        %p101 = pneg %p58
        %p102 = pneg %p55
        %s103 = sand.u32 %s45, 1
        %s104 = scalar_lea.sflag [#allocation4], %s103
        %s105 = sand.u32 %s45, 1
        %s106 = smul.addr %s105, 8
        %s107 = scalar_lea.vmem [#allocation5], %s106
        %v108 = vld [vmem:[#allocation2] sm:$0xff]
        %v109 = vadd.f32 %v108, 1.0
        %110 = vst [vmem:[%s107] sm:$0xff] %v109
        %s111 = sand.u32 %s45, 1
        %s112 = scalar_lea.sflag [#allocation4], %s111
        %s113 = sand.u32 %s45, 1
        %s114 = smul.addr %s113, 8
        %s115 = scalar_lea.vmem [#allocation5], %s114
        // Predicated region
        $region29: #{tpu_custom_call.1} parent=23 // pred_check
          %p116 = pneg %p55
        $region30: #{tpu_custom_call.1} parent=23 // pred_check_branch
          %118 = sbr.rel (%p116) target = $region32
        $region31: #{tpu_custom_call.1} parent=23 // pred_region
          %s120 = ssub.s32 128, 128
          %121 = vsyncadd %s112, %s120
          %s122 = smul.addr %s16, 128
          %s123 = scalar_lea.hbm %s1, %s122
          %s125 = sshll.u32 %s115, 4
          %s126 = int_to_ptr.vmem [resolvable:$true] %s125
          %128 = dma.vmem_to_hbm [thread:$0]  %s126, 128, %s123, %s112
        $region32: #{tpu_custom_call.1} parent=23 // pred_fallthru
          _
      $region24: #{tpu_custom_call.1} parent=5 // pred_fallthru
        _
      %p129 = scmp.le.s32.totalorder 2, %s11
      // Predicated region
      $region33: #{tpu_custom_call.1} parent=5 // pred_check
        %p130 = pneg %p129
      $region34: #{tpu_custom_call.1} parent=5 // pred_check_branch
        %132 = sbr.rel (%p130) target = $region36
      $region35: #{tpu_custom_call.1} parent=5 // pred_region
        %s133 = ssub.s32 %s11, 2
        // Predicated region
        $region37: #{tpu_custom_call.1} parent=35 // pred_check
          %p134 = pneg %p61
        $region38: #{tpu_custom_call.1} parent=35 // pred_check_branch
          %136 = sbr.rel (%p134) target = $region40
        $region39: #{tpu_custom_call.1} parent=35 // pred_region
          %s137 = sand.u32 %s46, 1
          %s138 = scalar_lea.sflag [#allocation4], %s137
          %s139 = sand.u32 %s46, 1
          %s140 = smul.addr %s139, 8
          %s141 = scalar_lea.vmem [#allocation5], %s140
          %142 = dma.done %s138, 128
        $region40: #{tpu_custom_call.1} parent=35 // pred_fallthru
          _
      $region36: #{tpu_custom_call.1} parent=5 // pred_fallthru
        _
    $region6: #{tpu_custom_call.1} parent=1 // loop_footer
      %s15 = sadd.s32 1, %s11
    $region7: #{tpu_custom_call.1} parent=1 // loop_footer_branch
      %10 = sbr.rel target = $region3
    $region8: #{tpu_custom_call.1} parent=1 // loop_exit
      _
    %143 = vsyncpa [#allocation3], 1
    %s144 = scalar_lea.sflag [#allocation3], 1
    %145 = vsyncpa %s144, 1
    %146 = vsyncpa [#allocation4], 1
    %s147 = scalar_lea.sflag [#allocation4], 1
    %148 = vsyncpa %s147, 1

// kernel: _decoder_forward.1
$region0: #{_decoder_forward.1}
  #allocation0 [shape = 'u32[]', space=smem, size = 0x4, offset = 0x4, fixed_abs, tag = 'smem constant byte address 0x4 - core index']
  #allocation1 [shape = 'u32[144,128]{1,0:T(1,128)}', space=vmem, size = 0x12000, scoped, tag = 'internal scratch']
  %s0 = inlined_call_operand.hbm [shape: f32[8,20], index: 0, kind: input, shape index: {}]
  %s1 = inlined_call_operand.hbm [shape: bf16[20,400], index: 1, kind: input, shape index: {}]
  %s2 = inlined_call_operand.hbm [shape: f32[1,400], index: 2, kind: input, shape index: {}]
  %s3 = inlined_call_operand.hbm [shape: bf16[400,784], index: 3, kind: input, shape index: {}]
  %s4 = inlined_call_operand.vmem [shape: f32[1,784], index: 4, kind: input, shape index: {}]
  %s5 = inlined_call_operand.hbm [shape: f32[8,784], index: 5, kind: output, shape index: {}]
  %s6 = sld [smem:[#allocation0]]
  $region46: #{_decoder_forward.1} parent=0
    _
  %s8 = ssub.s32 1, %s6
  %s9 = scalar_select 0, %s8, %s6
  $region1: #{_decoder_forward.1} parent=0
    #allocation2 [shape = 'u8[4096]{0}', space=vmem, size = 0x1000, scoped, tag = 'input window, operand 0, single buffered']
    #allocation3 [shape = 's32[1]{0}', space=sflag, size = 0x4, scoped, tag = 'scoped memory for _decoder_forward.1']
    #allocation4 [shape = 's32[1]{0}', space=sflag, size = 0x4, scoped, tag = 'scoped memory for _decoder_forward.1']
    #allocation5 [shape = 'u8[24576]{0}', space=vmem, size = 0x6000, scoped, tag = 'input window, operand 1, single buffered']
    #allocation6 [shape = 's32[1]{0}', space=sflag, size = 0x4, scoped, tag = 'scoped memory for _decoder_forward.1']
    #allocation7 [shape = 'u8[2048]{0}', space=vmem, size = 0x800, scoped, tag = 'input window, operand 2, single buffered']
    #allocation8 [shape = 'u8[716800]{0}', space=vmem, size = 0xaf000, scoped, tag = 'input window, operand 3, single buffered']
    #allocation9 [shape = 's32[1]{0}', space=sflag, size = 0x4, scoped, tag = 'scoped memory for _decoder_forward.1']
    #allocation10 [shape = 'u8[28672]{0}', space=vmem, size = 0x7000, scoped, tag = 'output window, operand 0, single buffered']
    %10 = vsyncpa [#allocation3], 0
    %11 = vsyncpa [#allocation6], 0
    %12 = vsyncpa [#allocation9], 0
    %13 = vsyncpa [#allocation4], 0
    // Predicated region
    $region2: #{_decoder_forward.1} parent=1 // pred_check
      _
    $region3: #{_decoder_forward.1} parent=1 // pred_check_branch
      %15 = sbr.rel (0) target = $region5
    $region4: #{_decoder_forward.1} parent=1 // pred_region
      %s17 = ssub.s32 128, 128
      %18 = vsyncadd [#allocation3], %s17
      %s20 = sshll.u32 [#allocation2], 4
      %s21 = int_to_ptr.vmem [resolvable:$true] %s20
      %23 = dma.hbm_to_vmem [thread:$0]  %s0, 128, %s21, [#allocation3]
    $region5: #{_decoder_forward.1} parent=1 // pred_fallthru
      _
    // Predicated region
    $region6: #{_decoder_forward.1} parent=1 // pred_check
      _
    $region7: #{_decoder_forward.1} parent=1 // pred_check_branch
      %25 = sbr.rel (0) target = $region9
    $region8: #{_decoder_forward.1} parent=1 // pred_region
      %s27 = ssub.s32 768, 768
      %28 = vsyncadd [#allocation6], %s27
      %s29 = sshll.u32 [#allocation5], 4
      %s30 = int_to_ptr.vmem [resolvable:$true] %s29
      %35 = dma.hbm_to_vmem [thread:$0]  %s1, 768, %s30, [#allocation6], 256, 256, 16
    $region9: #{_decoder_forward.1} parent=1 // pred_fallthru
      _
    // Predicated region
    $region10: #{_decoder_forward.1} parent=1 // pred_check
      _
    $region11: #{_decoder_forward.1} parent=1 // pred_check_branch
      %37 = sbr.rel (0) target = $region13
    $region12: #{_decoder_forward.1} parent=1 // pred_region
      %s39 = ssub.s32 64, 64
      %40 = vsyncadd [#allocation6], %s39
      %s42 = sshll.u32 [#allocation7], 4
      %s43 = int_to_ptr.vmem [resolvable:$true] %s42
      %45 = dma.hbm_to_vmem [thread:$0]  %s2, 64, %s43, [#allocation6]
    $region13: #{_decoder_forward.1} parent=1 // pred_fallthru
      _
    // Predicated region
    $region14: #{_decoder_forward.1} parent=1 // pred_check
      _
    $region15: #{_decoder_forward.1} parent=1 // pred_check_branch
      %47 = sbr.rel (0) target = $region17
    $region16: #{_decoder_forward.1} parent=1 // pred_region
      %s49 = ssub.s32 22400, 22400
      %50 = vsyncadd [#allocation9], %s49
      %s51 = sshll.u32 [#allocation8], 4
      %s52 = int_to_ptr.vmem [resolvable:$true] %s51
      %57 = dma.hbm_to_vmem [thread:$0]  %s3, 22400, %s52, [#allocation9], 448, 448, 28
    $region17: #{_decoder_forward.1} parent=1 // pred_fallthru
      _
    // Predicated region
    $region18: #{_decoder_forward.1} parent=1 // pred_check
      _
    $region19: #{_decoder_forward.1} parent=1 // pred_check_branch
      %59 = sbr.rel (0) target = $region21
    $region20: #{_decoder_forward.1} parent=1 // pred_region
      _
    $region21: #{_decoder_forward.1} parent=1 // pred_fallthru
      _
    // Predicated region
    $region22: #{_decoder_forward.1} parent=1 // pred_check
      _
    $region23: #{_decoder_forward.1} parent=1 // pred_check_branch
      %61 = sbr.rel (0) target = $region25
    $region24: #{_decoder_forward.1} parent=1 // pred_region
      %62 = dma.done [#allocation3], 128
    $region25: #{_decoder_forward.1} parent=1 // pred_fallthru
      _
    // Predicated region
    $region26: #{_decoder_forward.1} parent=1 // pred_check
      _
    $region27: #{_decoder_forward.1} parent=1 // pred_check_branch
      %64 = sbr.rel (0) target = $region29
    $region28: #{_decoder_forward.1} parent=1 // pred_region
      %65 = dma.done [#allocation6], 768
    $region29: #{_decoder_forward.1} parent=1 // pred_fallthru
      _
    // Predicated region
    $region30: #{_decoder_forward.1} parent=1 // pred_check
      _
    $region31: #{_decoder_forward.1} parent=1 // pred_check_branch
      %67 = sbr.rel (0) target = $region33
    $region32: #{_decoder_forward.1} parent=1 // pred_region
      %68 = dma.done [#allocation6], 64
    $region33: #{_decoder_forward.1} parent=1 // pred_fallthru
      _
    // Predicated region
    $region34: #{_decoder_forward.1} parent=1 // pred_check
      _
    $region35: #{_decoder_forward.1} parent=1 // pred_check_branch
      %70 = sbr.rel (0) target = $region37
    $region36: #{_decoder_forward.1} parent=1 // pred_region
      %71 = dma.done [#allocation9], 22400
    $region37: #{_decoder_forward.1} parent=1 // pred_fallthru
      _
    %v73 = vld [vmem:[#allocation2] sm:$0xff]
    %v74 = vpack.c.bf16 %v73, %v73
    %v75 = vld [vmem:[#allocation5] sm:$0xff]
    %v76 = vld [vmem:[#allocation5 + $0x8] sm:$0xff]
    %v77 = vld [vmem:[#allocation5 + $0x10] sm:$0xff]
    %v78 = vld [vmem:[#allocation5 + $0x18] sm:$0xff]
    %v79 = vld [vmem:[#allocation5 + $0x20] sm:$0x33]
    %v80 = vld [vmem:[#allocation5 + $0x28] sm:$0x33]
    %v81 = vld [vmem:[#allocation7] sm:$0xf]
    %v83 = vlaneseq
    %v84 = vshrl.u32 %v83, 7
    %v85 = vsub.s32 0, %v84
    %v86 = vrot.slane %v81, %v85
    %v87 = vlaneseq
    %v88 = vshrl.u32 %v87, 7
    %v89 = vsub.s32 1, %v88
    %v90 = vrot.slane %v81, %v89
    %v91 = vlaneseq
    %v92 = vshrl.u32 %v91, 7
    %v93 = vsub.s32 2, %v92
    %v94 = vrot.slane %v81, %v93
    %v95 = vlaneseq
    %v96 = vshrl.u32 %v95, 7
    %v97 = vsub.s32 3, %v96
    %v98 = vrot.slane %v81, %v97
    %v109 = vunpack.c.l.b16 %v75
    %v110 = vunpack.c.h.b16 %v75
    %v111 = vunpack.c.l.b16 %v76
    %v112 = vunpack.c.h.b16 %v76
    %v113 = vunpack.c.l.b16 %v77
    %v114 = vunpack.c.h.b16 %v77
    %v115 = vunpack.c.l.b16 %v78
    %v116 = vunpack.c.h.b16 %v78
    %v117 = vunpack.c.l.b16 %v79
    %v118 = vunpack.c.h.b16 %v79
    %v119 = vunpack.c.l.b16 %v80
    %v120 = vunpack.c.h.b16 %v80
    %v121 = vpack.c.b16 %v113, %v109
    %v122 = vpack.c.b16 %v114, %v110
    %v123 = vpack.c.b16 %v115, %v111
    %v124 = vpack.c.b16 %v116, %v112
    %v125 = vpack.c.b16 %v117, %v117
    %v126 = vpack.c.b16 %v118, %v118
    %v127 = vpack.c.b16 %v119, %v119
    %v128 = vpack.c.b16 %v120, %v120
    %vm133 = vcmask 162816
    %v135 = vsel %vm133, %v74, 0
    %vm137 = vcmask 1041408
    %v139 = vsel %vm137, %v125, 0
    %v142 = vsel %vm137, %v126, 0
    %v145 = vsel %vm137, %v127, 0
    %v148 = vsel %vm137, %v128, 0
    %150 = vmatprep.subr.bf16.mxu0 %v122
    %151 = vmatpush1.bf16.msra.mxu0 %v121
    %152 = vmatprep.subr.bf16.mxu0 %v142
    %153 = vmatpush1.bf16.msra.mxu0 %v139
    %154 = vmatprep.subr.bf16.mxu0 0
    %155 = vmatpush1.bf16.msra.mxu0 0
    %156 = vmatprep.subr.bf16.mxu0 0
    %157 = vmatpush1.bf16.msra.mxu0 0
    %158 = vmatprep.subr.bf16.mxu0 0
    %159 = vmatpush1.bf16.msra.mxu0 0
    %160 = vmatprep.subr.bf16.mxu0 0
    %161 = vmatpush1.bf16.msra.mxu0 0
    %162 = vmatprep.subr.bf16.mxu0 0
    %163 = vmatpush1.bf16.msra.mxu0 0
    %164 = vmatprep.subr.bf16.mxu0 0
    %165 = vmatpush1.bf16.msra.mxu0 0
    %166 = vmatprep.subr.bf16.mxu0 0
    %167 = vmatpush1.bf16.msra.mxu0 0
    %168 = vmatprep.subr.bf16.mxu0 0
    %169 = vmatpush1.bf16.msra.mxu0 0
    %170 = vmatprep.subr.bf16.mxu0 0
    %171 = vmatpush1.bf16.msra.mxu0 0
    %172 = vmatprep.subr.bf16.mxu0 0
    %173 = vmatpush1.bf16.msra.mxu0 0
    %174 = vmatprep.subr.bf16.mxu0 0
    %175 = vmatpush1.bf16.msra.mxu0 0
    %176 = vmatprep.subr.bf16.mxu0 0
    %177 = vmatpush1.bf16.msra.mxu0 0
    %178 = vmatprep.subr.bf16.mxu0 0
    %179 = vmatpush1.bf16.msra.mxu0 0
    %180 = vmatprep.subr.bf16.mxu0 0
    %181 = vmatpush1.bf16.msra.mxu0 0
    %182 = vmatprep.mubr.bf16.mxu0 0
    %183 = vmatmul.mubr.bf16.gmra.mrb[0].mxu0 %v135
    %v184 = vpop.f32.mrb[0].mxu0
    %v185 = vadd.f32 %v86, %v184
    %v186 = vpop.f32.mrb[0].mxu0
    %v187 = vadd.f32 %v90, %v186
    %v188 = vpop.f32.mrb[0].mxu0
    %v189 = vpop.f32.mrb[0].mxu0
    %190 = vdwg.mxu0
    %191 = vmatprep.subr.bf16.mxu0 %v124
    %192 = vmatpush1.bf16.msra.mxu0 %v123
    %193 = vmatprep.subr.bf16.mxu0 %v148
    %194 = vmatpush1.bf16.msra.mxu0 %v145
    %195 = vmatprep.subr.bf16.mxu0 0
    %196 = vmatpush1.bf16.msra.mxu0 0
    %197 = vmatprep.subr.bf16.mxu0 0
    %198 = vmatpush1.bf16.msra.mxu0 0
    %199 = vmatprep.subr.bf16.mxu0 0
    %200 = vmatpush1.bf16.msra.mxu0 0
    %201 = vmatprep.subr.bf16.mxu0 0
    %202 = vmatpush1.bf16.msra.mxu0 0
    %203 = vmatprep.subr.bf16.mxu0 0
    %204 = vmatpush1.bf16.msra.mxu0 0
    %205 = vmatprep.subr.bf16.mxu0 0
    %206 = vmatpush1.bf16.msra.mxu0 0
    %207 = vmatprep.subr.bf16.mxu0 0
    %208 = vmatpush1.bf16.msra.mxu0 0
    %209 = vmatprep.subr.bf16.mxu0 0
    %210 = vmatpush1.bf16.msra.mxu0 0
    %211 = vmatprep.subr.bf16.mxu0 0
    %212 = vmatpush1.bf16.msra.mxu0 0
    %213 = vmatprep.subr.bf16.mxu0 0
    %214 = vmatpush1.bf16.msra.mxu0 0
    %215 = vmatprep.subr.bf16.mxu0 0
    %216 = vmatpush1.bf16.msra.mxu0 0
    %217 = vmatprep.subr.bf16.mxu0 0
    %218 = vmatpush1.bf16.msra.mxu0 0
    %219 = vmatprep.subr.bf16.mxu0 0
    %220 = vmatpush1.bf16.msra.mxu0 0
    %221 = vmatprep.subr.bf16.mxu0 0
    %222 = vmatpush1.bf16.msra.mxu0 0
    %223 = vmatprep.mubr.bf16.mxu0 0
    %224 = vmatmul.mubr.bf16.gmra.mrb[0].mxu0 %v135
    %v225 = vpop.f32.mrb[0].mxu0
    %v226 = vadd.f32 %v94, %v225
    %v227 = vpop.f32.mrb[0].mxu0
    %v228 = vadd.f32 %v98, %v227
    %v229 = vpop.f32.mrb[0].mxu0
    %v230 = vpop.f32.mrb[0].mxu0
    %231 = vdwg.mxu0
    %v232 = vmax.f32 %v185, 0.0
    %v233 = vmax.f32 %v187, 0.0
    %v234 = vmax.f32 %v226, 0.0
    %v235 = vmax.f32 %v228, 0.0
    %v236 = vpack.c.bf16 %v232, %v232
    %v237 = vpack.c.bf16 %v233, %v233
    %v238 = vpack.c.bf16 %v234, %v234
    %v239 = vpack.c.bf16 %v235, %v235
    %v240 = vld [vmem:[#allocation8] sm:$0xff]
    %v241 = vld [vmem:[#allocation8 + $0x8] sm:$0xff]
    %v242 = vld [vmem:[#allocation8 + $0x10] sm:$0xff]
    %v243 = vld [vmem:[#allocation8 + $0x18] sm:$0xf]
    %v244 = vld [vmem:[#allocation8 + $0x1c] sm:$0xff]
    %v245 = vld [vmem:[#allocation8 + $0x24] sm:$0xff]
    %v246 = vld [vmem:[#allocation8 + $0x2c] sm:$0xff]
    %v247 = vld [vmem:[#allocation8 + $0x34] sm:$0xf]
    %v248 = vld [vmem:[#allocation8 + $0x38] sm:$0xff]
    %v249 = vld [vmem:[#allocation8 + $0x40] sm:$0xff]
    %v250 = vld [vmem:[#allocation8 + $0x48] sm:$0xff]
    %v251 = vld [vmem:[#allocation8 + $0x50] sm:$0xf]
    %v252 = vld [vmem:[#allocation8 + $0x54] sm:$0xff]
    %v253 = vld [vmem:[#allocation8 + $0x5c] sm:$0xff]
    %v254 = vld [vmem:[#allocation8 + $0x64] sm:$0xff]
    %v255 = vld [vmem:[#allocation8 + $0x6c] sm:$0xf]
    %v256 = vld [vmem:[#allocation8 + $0x70] sm:$0xff]
    %v257 = vld [vmem:[#allocation8 + $0x78] sm:$0xff]
    %v258 = vld [vmem:[#allocation8 + $0x80] sm:$0xff]
    %v259 = vld [vmem:[#allocation8 + $0x88] sm:$0xf]
    %v260 = vld [vmem:[#allocation8 + $0x8c] sm:$0xff]
    %v261 = vld [vmem:[#allocation8 + $0x94] sm:$0xff]
    %v262 = vld [vmem:[#allocation8 + $0x9c] sm:$0xff]
    %v263 = vld [vmem:[#allocation8 + $0xa4] sm:$0xf]
    %v264 = vld [vmem:[#allocation8 + $0xa8] sm:$0xff]
    %v265 = vld [vmem:[#allocation8 + $0xb0] sm:$0xff]
    %v266 = vld [vmem:[#allocation8 + $0xb8] sm:$0xff]
    %v267 = vld [vmem:[#allocation8 + $0xc0] sm:$0xf]
    %v268 = vld [vmem:[#allocation8 + $0xc4] sm:$0xff]
    %v269 = vld [vmem:[#allocation8 + $0xcc] sm:$0xff]
    %v270 = vld [vmem:[#allocation8 + $0xd4] sm:$0xff]
    %v271 = vld [vmem:[#allocation8 + $0xdc] sm:$0xf]
    %v272 = vld [vmem:[#allocation8 + $0xe0] sm:$0xff]
    %v273 = vld [vmem:[#allocation8 + $0xe8] sm:$0xff]
    %v274 = vld [vmem:[#allocation8 + $0xf0] sm:$0xff]
    %v275 = vld [vmem:[#allocation8 + $0xf8] sm:$0xf]
    %v276 = vld [vmem:[#allocation8 + $0xfc] sm:$0xff]
    %v277 = vld [vmem:[#allocation8 + $0x104] sm:$0xff]
    %v278 = vld [vmem:[#allocation8 + $0x10c] sm:$0xff]
    %v279 = vld [vmem:[#allocation8 + $0x114] sm:$0xf]
    %v280 = vld [vmem:[#allocation8 + $0x118] sm:$0xff]
    %v281 = vld [vmem:[#allocation8 + $0x120] sm:$0xff]
    %v282 = vld [vmem:[#allocation8 + $0x128] sm:$0xff]
    %v283 = vld [vmem:[#allocation8 + $0x130] sm:$0xf]
    %v284 = vld [vmem:[#allocation8 + $0x134] sm:$0xff]
    %v285 = vld [vmem:[#allocation8 + $0x13c] sm:$0xff]
    %v286 = vld [vmem:[#allocation8 + $0x144] sm:$0xff]
    %v287 = vld [vmem:[#allocation8 + $0x14c] sm:$0xf]
    %v288 = vld [vmem:[#allocation8 + $0x150] sm:$0xff]
    %v289 = vld [vmem:[#allocation8 + $0x158] sm:$0xff]
    %v290 = vld [vmem:[#allocation8 + $0x160] sm:$0xff]
    %v291 = vld [vmem:[#allocation8 + $0x168] sm:$0xf]
    %v292 = vld [vmem:[#allocation8 + $0x16c] sm:$0xff]
    %v293 = vld [vmem:[#allocation8 + $0x174] sm:$0xff]
    %v294 = vld [vmem:[#allocation8 + $0x17c] sm:$0xff]
    %v295 = vld [vmem:[#allocation8 + $0x184] sm:$0xf]
    %v296 = vld [vmem:[#allocation8 + $0x188] sm:$0xff]
    %v297 = vld [vmem:[#allocation8 + $0x190] sm:$0xff]
    %v298 = vld [vmem:[#allocation8 + $0x198] sm:$0xff]
    %v299 = vld [vmem:[#allocation8 + $0x1a0] sm:$0xf]
    %v300 = vld [vmem:[#allocation8 + $0x1a4] sm:$0xff]
    %v301 = vld [vmem:[#allocation8 + $0x1ac] sm:$0xff]
    %v302 = vld [vmem:[#allocation8 + $0x1b4] sm:$0xff]
    %v303 = vld [vmem:[#allocation8 + $0x1bc] sm:$0xf]
    %v304 = vld [vmem:[#allocation8 + $0x1c0] sm:$0xff]
    %v305 = vld [vmem:[#allocation8 + $0x1c8] sm:$0xff]
    %v306 = vld [vmem:[#allocation8 + $0x1d0] sm:$0xff]
    %v307 = vld [vmem:[#allocation8 + $0x1d8] sm:$0xf]
    %v308 = vld [vmem:[#allocation8 + $0x1dc] sm:$0xff]
    %v309 = vld [vmem:[#allocation8 + $0x1e4] sm:$0xff]
    %v310 = vld [vmem:[#allocation8 + $0x1ec] sm:$0xff]
    %v311 = vld [vmem:[#allocation8 + $0x1f4] sm:$0xf]
    %v312 = vld [vmem:[#allocation8 + $0x1f8] sm:$0xff]
    %v313 = vld [vmem:[#allocation8 + $0x200] sm:$0xff]
    %v314 = vld [vmem:[#allocation8 + $0x208] sm:$0xff]
    %v315 = vld [vmem:[#allocation8 + $0x210] sm:$0xf]
    %v316 = vld [vmem:[#allocation8 + $0x214] sm:$0xff]
    %v317 = vld [vmem:[#allocation8 + $0x21c] sm:$0xff]
    %v318 = vld [vmem:[#allocation8 + $0x224] sm:$0xff]
    %v319 = vld [vmem:[#allocation8 + $0x22c] sm:$0xf]
    %v320 = vld [vmem:[#allocation8 + $0x230] sm:$0xff]
    %v321 = vld [vmem:[#allocation8 + $0x238] sm:$0xff]
    %v322 = vld [vmem:[#allocation8 + $0x240] sm:$0xff]
    %v323 = vld [vmem:[#allocation8 + $0x248] sm:$0xf]
    %v324 = vld [vmem:[#allocation8 + $0x24c] sm:$0xff]
    %v325 = vld [vmem:[#allocation8 + $0x254] sm:$0xff]
    %v326 = vld [vmem:[#allocation8 + $0x25c] sm:$0xff]
    %v327 = vld [vmem:[#allocation8 + $0x264] sm:$0xf]
    %v328 = vld [vmem:[#allocation8 + $0x268] sm:$0xff]
    %v329 = vld [vmem:[#allocation8 + $0x270] sm:$0xff]
    %v330 = vld [vmem:[#allocation8 + $0x278] sm:$0xff]
    %v331 = vld [vmem:[#allocation8 + $0x280] sm:$0xf]
    %v332 = vld [vmem:[#allocation8 + $0x284] sm:$0xff]
    %v333 = vld [vmem:[#allocation8 + $0x28c] sm:$0xff]
    %v334 = vld [vmem:[#allocation8 + $0x294] sm:$0xff]
    %v335 = vld [vmem:[#allocation8 + $0x29c] sm:$0xf]
    %v336 = vld [vmem:[#allocation8 + $0x2a0] sm:$0xff]
    %v337 = vld [vmem:[#allocation8 + $0x2a8] sm:$0xff]
    %v338 = vld [vmem:[#allocation8 + $0x2b0] sm:$0xff]
    %v339 = vld [vmem:[#allocation8 + $0x2b8] sm:$0xf]
    %v340 = vld [vmem:[#allocation8 + $0x2bc] sm:$0xff]
    %v341 = vld [vmem:[#allocation8 + $0x2c4] sm:$0xff]
    %v342 = vld [vmem:[#allocation8 + $0x2cc] sm:$0xff]
    %v343 = vld [vmem:[#allocation8 + $0x2d4] sm:$0xf]
    %v344 = vld [vmem:[#allocation8 + $0x2d8] sm:$0xff]
    %v345 = vld [vmem:[#allocation8 + $0x2e0] sm:$0xff]
    %v346 = vld [vmem:[#allocation8 + $0x2e8] sm:$0xff]
    %v347 = vld [vmem:[#allocation8 + $0x2f0] sm:$0xf]
    %v348 = vld [vmem:[#allocation8 + $0x2f4] sm:$0xff]
    %v349 = vld [vmem:[#allocation8 + $0x2fc] sm:$0xff]
    %v350 = vld [vmem:[#allocation8 + $0x304] sm:$0xff]
    %v351 = vld [vmem:[#allocation8 + $0x30c] sm:$0xf]
    %v352 = vld [vmem:[#allocation8 + $0x310] sm:$0xff]
    %v353 = vld [vmem:[#allocation8 + $0x318] sm:$0xff]
    %v354 = vld [vmem:[#allocation8 + $0x320] sm:$0xff]
    %v355 = vld [vmem:[#allocation8 + $0x328] sm:$0xf]
    %v356 = vld [vmem:[#allocation8 + $0x32c] sm:$0xff]
    %v357 = vld [vmem:[#allocation8 + $0x334] sm:$0xff]
    %v358 = vld [vmem:[#allocation8 + $0x33c] sm:$0xff]
    %v359 = vld [vmem:[#allocation8 + $0x344] sm:$0xf]
    %v360 = vld [vmem:[#allocation8 + $0x348] sm:$0xff]
    %v361 = vld [vmem:[#allocation8 + $0x350] sm:$0xff]
    %v362 = vld [vmem:[#allocation8 + $0x358] sm:$0xff]
    %v363 = vld [vmem:[#allocation8 + $0x360] sm:$0xf]
    %v364 = vld [vmem:[#allocation8 + $0x364] sm:$0xff]
    %v365 = vld [vmem:[#allocation8 + $0x36c] sm:$0xff]
    %v366 = vld [vmem:[#allocation8 + $0x374] sm:$0xff]
    %v367 = vld [vmem:[#allocation8 + $0x37c] sm:$0xf]
    %v368 = vld [vmem:[#allocation8 + $0x380] sm:$0xff]
    %v369 = vld [vmem:[#allocation8 + $0x388] sm:$0xff]
    %v370 = vld [vmem:[#allocation8 + $0x390] sm:$0xff]
    %v371 = vld [vmem:[#allocation8 + $0x398] sm:$0xf]
    %v372 = vld [vmem:[#allocation8 + $0x39c] sm:$0xff]
    %v373 = vld [vmem:[#allocation8 + $0x3a4] sm:$0xff]
    %v374 = vld [vmem:[#allocation8 + $0x3ac] sm:$0xff]
    %v375 = vld [vmem:[#allocation8 + $0x3b4] sm:$0xf]
    %v376 = vld [vmem:[#allocation8 + $0x3b8] sm:$0xff]
    %v377 = vld [vmem:[#allocation8 + $0x3c0] sm:$0xff]
    %v378 = vld [vmem:[#allocation8 + $0x3c8] sm:$0xff]
    %v379 = vld [vmem:[#allocation8 + $0x3d0] sm:$0xf]
    %v380 = vld [vmem:[#allocation8 + $0x3d4] sm:$0xff]
    %v381 = vld [vmem:[#allocation8 + $0x3dc] sm:$0xff]
    %v382 = vld [vmem:[#allocation8 + $0x3e4] sm:$0xff]
    %v383 = vld [vmem:[#allocation8 + $0x3ec] sm:$0xf]
    %v384 = vld [vmem:[#allocation8 + $0x3f0] sm:$0xff]
    %v385 = vld [vmem:[#allocation8 + $0x3f8] sm:$0xff]
    %v386 = vld [vmem:[#allocation8 + $0x400] sm:$0xff]
    %v387 = vld [vmem:[#allocation8 + $0x408] sm:$0xf]
    %v388 = vld [vmem:[#allocation8 + $0x40c] sm:$0xff]
    %v389 = vld [vmem:[#allocation8 + $0x414] sm:$0xff]
    %v390 = vld [vmem:[#allocation8 + $0x41c] sm:$0xff]
    %v391 = vld [vmem:[#allocation8 + $0x424] sm:$0xf]
    %v392 = vld [vmem:[#allocation8 + $0x428] sm:$0xff]
    %v393 = vld [vmem:[#allocation8 + $0x430] sm:$0xff]
    %v394 = vld [vmem:[#allocation8 + $0x438] sm:$0xff]
    %v395 = vld [vmem:[#allocation8 + $0x440] sm:$0xf]
    %v396 = vld [vmem:[#allocation8 + $0x444] sm:$0xff]
    %v397 = vld [vmem:[#allocation8 + $0x44c] sm:$0xff]
    %v398 = vld [vmem:[#allocation8 + $0x454] sm:$0xff]
    %v399 = vld [vmem:[#allocation8 + $0x45c] sm:$0xf]
    %v400 = vld [vmem:[#allocation8 + $0x460] sm:$0xff]
    %v401 = vld [vmem:[#allocation8 + $0x468] sm:$0xff]
    %v402 = vld [vmem:[#allocation8 + $0x470] sm:$0xff]
    %v403 = vld [vmem:[#allocation8 + $0x478] sm:$0xf]
    %v404 = vld [vmem:[#allocation8 + $0x47c] sm:$0xff]
    %v405 = vld [vmem:[#allocation8 + $0x484] sm:$0xff]
    %v406 = vld [vmem:[#allocation8 + $0x48c] sm:$0xff]
    %v407 = vld [vmem:[#allocation8 + $0x494] sm:$0xf]
    %v408 = vld [vmem:[#allocation8 + $0x498] sm:$0xff]
    %v409 = vld [vmem:[#allocation8 + $0x4a0] sm:$0xff]
    %v410 = vld [vmem:[#allocation8 + $0x4a8] sm:$0xff]
    %v411 = vld [vmem:[#allocation8 + $0x4b0] sm:$0xf]
    %v412 = vld [vmem:[#allocation8 + $0x4b4] sm:$0xff]
    %v413 = vld [vmem:[#allocation8 + $0x4bc] sm:$0xff]
    %v414 = vld [vmem:[#allocation8 + $0x4c4] sm:$0xff]
    %v415 = vld [vmem:[#allocation8 + $0x4cc] sm:$0xf]
    %v416 = vld [vmem:[#allocation8 + $0x4d0] sm:$0xff]
    %v417 = vld [vmem:[#allocation8 + $0x4d8] sm:$0xff]
    %v418 = vld [vmem:[#allocation8 + $0x4e0] sm:$0xff]
    %v419 = vld [vmem:[#allocation8 + $0x4e8] sm:$0xf]
    %v420 = vld [vmem:[#allocation8 + $0x4ec] sm:$0xff]
    %v421 = vld [vmem:[#allocation8 + $0x4f4] sm:$0xff]
    %v422 = vld [vmem:[#allocation8 + $0x4fc] sm:$0xff]
    %v423 = vld [vmem:[#allocation8 + $0x504] sm:$0xf]
    %v424 = vld [vmem:[#allocation8 + $0x508] sm:$0xff]
    %v425 = vld [vmem:[#allocation8 + $0x510] sm:$0xff]
    %v426 = vld [vmem:[#allocation8 + $0x518] sm:$0xff]
    %v427 = vld [vmem:[#allocation8 + $0x520] sm:$0xf]
    %v428 = vld [vmem:[#allocation8 + $0x524] sm:$0xff]
    %v429 = vld [vmem:[#allocation8 + $0x52c] sm:$0xff]
    %v430 = vld [vmem:[#allocation8 + $0x534] sm:$0xff]
    %v431 = vld [vmem:[#allocation8 + $0x53c] sm:$0xf]
    %v432 = vld [vmem:[#allocation8 + $0x540] sm:$0xff]
    %v433 = vld [vmem:[#allocation8 + $0x548] sm:$0xff]
    %v434 = vld [vmem:[#allocation8 + $0x550] sm:$0xff]
    %v435 = vld [vmem:[#allocation8 + $0x558] sm:$0xf]
    %v436 = vld [vmem:[#allocation8 + $0x55c] sm:$0xff]
    %v437 = vld [vmem:[#allocation8 + $0x564] sm:$0xff]
    %v438 = vld [vmem:[#allocation8 + $0x56c] sm:$0xff]
    %v439 = vld [vmem:[#allocation8 + $0x574] sm:$0xf]
    %v440 = vld [vmem:[%s4] sm:$0x7f]
    %v442 = vlaneseq
    %v443 = vshrl.u32 %v442, 7
    %v444 = vsub.s32 0, %v443
    %v445 = vrot.slane %v440, %v444
    %v446 = vlaneseq
    %v447 = vshrl.u32 %v446, 7
    %v448 = vsub.s32 1, %v447
    %v449 = vrot.slane %v440, %v448
    %v450 = vlaneseq
    %v451 = vshrl.u32 %v450, 7
    %v452 = vsub.s32 2, %v451
    %v453 = vrot.slane %v440, %v452
    %v454 = vlaneseq
    %v455 = vshrl.u32 %v454, 7
    %v456 = vsub.s32 3, %v455
    %v457 = vrot.slane %v440, %v456
    %v458 = vlaneseq
    %v459 = vshrl.u32 %v458, 7
    %v460 = vsub.s32 4, %v459
    %v461 = vrot.slane %v440, %v460
    %v462 = vlaneseq
    %v463 = vshrl.u32 %v462, 7
    %v464 = vsub.s32 5, %v463
    %v465 = vrot.slane %v440, %v464
    %v466 = vlaneseq
    %v467 = vshrl.u32 %v466, 7
    %v468 = vsub.s32 6, %v467
    %v469 = vrot.slane %v440, %v468
    %v677 = vunpack.c.l.b16 %v240
    %v678 = vunpack.c.h.b16 %v240
    %v679 = vunpack.c.l.b16 %v241
    %v680 = vunpack.c.h.b16 %v241
    %v681 = vunpack.c.l.b16 %v242
    %v682 = vunpack.c.h.b16 %v242
    %v683 = vunpack.c.l.b16 %v243
    %v684 = vunpack.c.l.b16 %v244
    %v685 = vunpack.c.h.b16 %v244
    %v686 = vunpack.c.l.b16 %v245
    %v687 = vunpack.c.h.b16 %v245
    %v688 = vunpack.c.l.b16 %v246
    %v689 = vunpack.c.h.b16 %v246
    %v690 = vunpack.c.l.b16 %v247
    %v691 = vunpack.c.l.b16 %v248
    %v692 = vunpack.c.h.b16 %v248
    %v693 = vunpack.c.l.b16 %v249
    %v694 = vunpack.c.h.b16 %v249
    %v695 = vunpack.c.l.b16 %v250
    %v696 = vunpack.c.h.b16 %v250
    %v697 = vunpack.c.l.b16 %v251
    %v698 = vunpack.c.l.b16 %v252
    %v699 = vunpack.c.h.b16 %v252
    %v700 = vunpack.c.l.b16 %v253
    %v701 = vunpack.c.h.b16 %v253
    %v702 = vunpack.c.l.b16 %v254
    %v703 = vunpack.c.h.b16 %v254
    %v704 = vunpack.c.l.b16 %v255
    %v705 = vunpack.c.l.b16 %v256
    %v706 = vunpack.c.h.b16 %v256
    %v707 = vunpack.c.l.b16 %v257
    %v708 = vunpack.c.h.b16 %v257
    %v709 = vunpack.c.l.b16 %v258
    %v710 = vunpack.c.h.b16 %v258
    %v711 = vunpack.c.l.b16 %v259
    %v712 = vunpack.c.l.b16 %v260
    %v713 = vunpack.c.h.b16 %v260
    %v714 = vunpack.c.l.b16 %v261
    %v715 = vunpack.c.h.b16 %v261
    %v716 = vunpack.c.l.b16 %v262
    %v717 = vunpack.c.h.b16 %v262
    %v718 = vunpack.c.l.b16 %v263
    %v719 = vunpack.c.l.b16 %v264
    %v720 = vunpack.c.h.b16 %v264
    %v721 = vunpack.c.l.b16 %v265
    %v722 = vunpack.c.h.b16 %v265
    %v723 = vunpack.c.l.b16 %v266
    %v724 = vunpack.c.h.b16 %v266
    %v725 = vunpack.c.l.b16 %v267
    %v726 = vunpack.c.l.b16 %v268
    %v727 = vunpack.c.h.b16 %v268
    %v728 = vunpack.c.l.b16 %v269
    %v729 = vunpack.c.h.b16 %v269
    %v730 = vunpack.c.l.b16 %v270
    %v731 = vunpack.c.h.b16 %v270
    %v732 = vunpack.c.l.b16 %v271
    %v733 = vunpack.c.l.b16 %v272
    %v734 = vunpack.c.h.b16 %v272
    %v735 = vunpack.c.l.b16 %v273
    %v736 = vunpack.c.h.b16 %v273
    %v737 = vunpack.c.l.b16 %v274
    %v738 = vunpack.c.h.b16 %v274
    %v739 = vunpack.c.l.b16 %v275
    %v740 = vunpack.c.l.b16 %v276
    %v741 = vunpack.c.h.b16 %v276
    %v742 = vunpack.c.l.b16 %v277
    %v743 = vunpack.c.h.b16 %v277
    %v744 = vunpack.c.l.b16 %v278
    %v745 = vunpack.c.h.b16 %v278
    %v746 = vunpack.c.l.b16 %v279
    %v747 = vunpack.c.l.b16 %v280
    %v748 = vunpack.c.h.b16 %v280
    %v749 = vunpack.c.l.b16 %v281
    %v750 = vunpack.c.h.b16 %v281
    %v751 = vunpack.c.l.b16 %v282
    %v752 = vunpack.c.h.b16 %v282
    %v753 = vunpack.c.l.b16 %v283
    %v754 = vunpack.c.l.b16 %v284
    %v755 = vunpack.c.h.b16 %v284
    %v756 = vunpack.c.l.b16 %v285
    %v757 = vunpack.c.h.b16 %v285
    %v758 = vunpack.c.l.b16 %v286
    %v759 = vunpack.c.h.b16 %v286
    %v760 = vunpack.c.l.b16 %v287
    %v761 = vunpack.c.l.b16 %v288
    %v762 = vunpack.c.h.b16 %v288
    %v763 = vunpack.c.l.b16 %v289
    %v764 = vunpack.c.h.b16 %v289
    %v765 = vunpack.c.l.b16 %v290
    %v766 = vunpack.c.h.b16 %v290
    %v767 = vunpack.c.l.b16 %v291
    %v768 = vunpack.c.l.b16 %v292
    %v769 = vunpack.c.h.b16 %v292
    %v770 = vunpack.c.l.b16 %v293
    %v771 = vunpack.c.h.b16 %v293
    %v772 = vunpack.c.l.b16 %v294
    %v773 = vunpack.c.h.b16 %v294
    %v774 = vunpack.c.l.b16 %v295
    %v775 = vunpack.c.l.b16 %v296
    %v776 = vunpack.c.h.b16 %v296
    %v777 = vunpack.c.l.b16 %v297
    %v778 = vunpack.c.h.b16 %v297
    %v779 = vunpack.c.l.b16 %v298
    %v780 = vunpack.c.h.b16 %v298
    %v781 = vunpack.c.l.b16 %v299
    %v782 = vunpack.c.l.b16 %v300
    %v783 = vunpack.c.h.b16 %v300
    %v784 = vunpack.c.l.b16 %v301
    %v785 = vunpack.c.h.b16 %v301
    %v786 = vunpack.c.l.b16 %v302
    %v787 = vunpack.c.h.b16 %v302
    %v788 = vunpack.c.l.b16 %v303
    %v789 = vunpack.c.l.b16 %v304
    %v790 = vunpack.c.h.b16 %v304
    %v791 = vunpack.c.l.b16 %v305
    %v792 = vunpack.c.h.b16 %v305
    %v793 = vunpack.c.l.b16 %v306
    %v794 = vunpack.c.h.b16 %v306
    %v795 = vunpack.c.l.b16 %v307
    %v796 = vunpack.c.l.b16 %v308
    %v797 = vunpack.c.h.b16 %v308
    %v798 = vunpack.c.l.b16 %v309
    %v799 = vunpack.c.h.b16 %v309
    %v800 = vunpack.c.l.b16 %v310
    %v801 = vunpack.c.h.b16 %v310
    %v802 = vunpack.c.l.b16 %v311
    %v803 = vunpack.c.l.b16 %v312
    %v804 = vunpack.c.h.b16 %v312
    %v805 = vunpack.c.l.b16 %v313
    %v806 = vunpack.c.h.b16 %v313
    %v807 = vunpack.c.l.b16 %v314
    %v808 = vunpack.c.h.b16 %v314
    %v809 = vunpack.c.l.b16 %v315
    %v810 = vunpack.c.l.b16 %v316
    %v811 = vunpack.c.h.b16 %v316
    %v812 = vunpack.c.l.b16 %v317
    %v813 = vunpack.c.h.b16 %v317
    %v814 = vunpack.c.l.b16 %v318
    %v815 = vunpack.c.h.b16 %v318
    %v816 = vunpack.c.l.b16 %v319
    %v817 = vunpack.c.l.b16 %v320
    %v818 = vunpack.c.h.b16 %v320
    %v819 = vunpack.c.l.b16 %v321
    %v820 = vunpack.c.h.b16 %v321
    %v821 = vunpack.c.l.b16 %v322
    %v822 = vunpack.c.h.b16 %v322
    %v823 = vunpack.c.l.b16 %v323
    %v824 = vunpack.c.l.b16 %v324
    %v825 = vunpack.c.h.b16 %v324
    %v826 = vunpack.c.l.b16 %v325
    %v827 = vunpack.c.h.b16 %v325
    %v828 = vunpack.c.l.b16 %v326
    %v829 = vunpack.c.h.b16 %v326
    %v830 = vunpack.c.l.b16 %v327
    %v831 = vunpack.c.l.b16 %v328
    %v832 = vunpack.c.h.b16 %v328
    %v833 = vunpack.c.l.b16 %v329
    %v834 = vunpack.c.h.b16 %v329
    %v835 = vunpack.c.l.b16 %v330
    %v836 = vunpack.c.h.b16 %v330
    %v837 = vunpack.c.l.b16 %v331
    %v838 = vunpack.c.l.b16 %v332
    %v839 = vunpack.c.h.b16 %v332
    %v840 = vunpack.c.l.b16 %v333
    %v841 = vunpack.c.h.b16 %v333
    %v842 = vunpack.c.l.b16 %v334
    %v843 = vunpack.c.h.b16 %v334
    %v844 = vunpack.c.l.b16 %v335
    %v845 = vunpack.c.l.b16 %v336
    %v846 = vunpack.c.h.b16 %v336
    %v847 = vunpack.c.l.b16 %v337
    %v848 = vunpack.c.h.b16 %v337
    %v849 = vunpack.c.l.b16 %v338
    %v850 = vunpack.c.h.b16 %v338
    %v851 = vunpack.c.l.b16 %v339
    %v852 = vunpack.c.l.b16 %v340
    %v853 = vunpack.c.h.b16 %v340
    %v854 = vunpack.c.l.b16 %v341
    %v855 = vunpack.c.h.b16 %v341
    %v856 = vunpack.c.l.b16 %v342
    %v857 = vunpack.c.h.b16 %v342
    %v858 = vunpack.c.l.b16 %v343
    %v859 = vunpack.c.l.b16 %v344
    %v860 = vunpack.c.h.b16 %v344
    %v861 = vunpack.c.l.b16 %v345
    %v862 = vunpack.c.h.b16 %v345
    %v863 = vunpack.c.l.b16 %v346
    %v864 = vunpack.c.h.b16 %v346
    %v865 = vunpack.c.l.b16 %v347
    %v866 = vunpack.c.l.b16 %v348
    %v867 = vunpack.c.h.b16 %v348
    %v868 = vunpack.c.l.b16 %v349
    %v869 = vunpack.c.h.b16 %v349
    %v870 = vunpack.c.l.b16 %v350
    %v871 = vunpack.c.h.b16 %v350
    %v872 = vunpack.c.l.b16 %v351
    %v873 = vunpack.c.l.b16 %v352
    %v874 = vunpack.c.h.b16 %v352
    %v875 = vunpack.c.l.b16 %v353
    %v876 = vunpack.c.h.b16 %v353
    %v877 = vunpack.c.l.b16 %v354
    %v878 = vunpack.c.h.b16 %v354
    %v879 = vunpack.c.l.b16 %v355
    %v880 = vunpack.c.l.b16 %v356
    %v881 = vunpack.c.h.b16 %v356
    %v882 = vunpack.c.l.b16 %v357
    %v883 = vunpack.c.h.b16 %v357
    %v884 = vunpack.c.l.b16 %v358
    %v885 = vunpack.c.h.b16 %v358
    %v886 = vunpack.c.l.b16 %v359
    %v887 = vunpack.c.l.b16 %v360
    %v888 = vunpack.c.h.b16 %v360
    %v889 = vunpack.c.l.b16 %v361
    %v890 = vunpack.c.h.b16 %v361
    %v891 = vunpack.c.l.b16 %v362
    %v892 = vunpack.c.h.b16 %v362
    %v893 = vunpack.c.l.b16 %v363
    %v894 = vunpack.c.l.b16 %v364
    %v895 = vunpack.c.h.b16 %v364
    %v896 = vunpack.c.l.b16 %v365
    %v897 = vunpack.c.h.b16 %v365
    %v898 = vunpack.c.l.b16 %v366
    %v899 = vunpack.c.h.b16 %v366
    %v900 = vunpack.c.l.b16 %v367
    %v901 = vunpack.c.l.b16 %v368
    %v902 = vunpack.c.h.b16 %v368
    %v903 = vunpack.c.l.b16 %v369
    %v904 = vunpack.c.h.b16 %v369
    %v905 = vunpack.c.l.b16 %v370
    %v906 = vunpack.c.h.b16 %v370
    %v907 = vunpack.c.l.b16 %v371
    %v908 = vunpack.c.l.b16 %v372
    %v909 = vunpack.c.h.b16 %v372
    %v910 = vunpack.c.l.b16 %v373
    %v911 = vunpack.c.h.b16 %v373
    %v912 = vunpack.c.l.b16 %v374
    %v913 = vunpack.c.h.b16 %v374
    %v914 = vunpack.c.l.b16 %v375
    %v915 = vunpack.c.l.b16 %v376
    %v916 = vunpack.c.h.b16 %v376
    %v917 = vunpack.c.l.b16 %v377
    %v918 = vunpack.c.h.b16 %v377
    %v919 = vunpack.c.l.b16 %v378
    %v920 = vunpack.c.h.b16 %v378
    %v921 = vunpack.c.l.b16 %v379
    %v922 = vunpack.c.l.b16 %v380
    %v923 = vunpack.c.h.b16 %v380
    %v924 = vunpack.c.l.b16 %v381
    %v925 = vunpack.c.h.b16 %v381
    %v926 = vunpack.c.l.b16 %v382
    %v927 = vunpack.c.h.b16 %v382
    %v928 = vunpack.c.l.b16 %v383
    %v929 = vunpack.c.l.b16 %v384
    %v930 = vunpack.c.h.b16 %v384
    %v931 = vunpack.c.l.b16 %v385
    %v932 = vunpack.c.h.b16 %v385
    %v933 = vunpack.c.l.b16 %v386
    %v934 = vunpack.c.h.b16 %v386
    %v935 = vunpack.c.l.b16 %v387
    %v936 = vunpack.c.l.b16 %v388
    %v937 = vunpack.c.h.b16 %v388
    %v938 = vunpack.c.l.b16 %v389
    %v939 = vunpack.c.h.b16 %v389
    %v940 = vunpack.c.l.b16 %v390
    %v941 = vunpack.c.h.b16 %v390
    %v942 = vunpack.c.l.b16 %v391
    %v943 = vunpack.c.l.b16 %v392
    %v944 = vunpack.c.h.b16 %v392
    %v945 = vunpack.c.l.b16 %v393
    %v946 = vunpack.c.h.b16 %v393
    %v947 = vunpack.c.l.b16 %v394
    %v948 = vunpack.c.h.b16 %v394
    %v949 = vunpack.c.l.b16 %v395
    %v950 = vunpack.c.l.b16 %v396
    %v951 = vunpack.c.h.b16 %v396
    %v952 = vunpack.c.l.b16 %v397
    %v953 = vunpack.c.h.b16 %v397
    %v954 = vunpack.c.l.b16 %v398
    %v955 = vunpack.c.h.b16 %v398
    %v956 = vunpack.c.l.b16 %v399
    %v957 = vunpack.c.l.b16 %v400
    %v958 = vunpack.c.h.b16 %v400
    %v959 = vunpack.c.l.b16 %v401
    %v960 = vunpack.c.h.b16 %v401
    %v961 = vunpack.c.l.b16 %v402
    %v962 = vunpack.c.h.b16 %v402
    %v963 = vunpack.c.l.b16 %v403
    %v964 = vunpack.c.l.b16 %v404
    %v965 = vunpack.c.h.b16 %v404
    %v966 = vunpack.c.l.b16 %v405
    %v967 = vunpack.c.h.b16 %v405
    %v968 = vunpack.c.l.b16 %v406
    %v969 = vunpack.c.h.b16 %v406
    %v970 = vunpack.c.l.b16 %v407
    %v971 = vunpack.c.l.b16 %v408
    %v972 = vunpack.c.h.b16 %v408
    %v973 = vunpack.c.l.b16 %v409
    %v974 = vunpack.c.h.b16 %v409
    %v975 = vunpack.c.l.b16 %v410
    %v976 = vunpack.c.h.b16 %v410
    %v977 = vunpack.c.l.b16 %v411
    %v978 = vunpack.c.l.b16 %v412
    %v979 = vunpack.c.h.b16 %v412
    %v980 = vunpack.c.l.b16 %v413
    %v981 = vunpack.c.h.b16 %v413
    %v982 = vunpack.c.l.b16 %v414
    %v983 = vunpack.c.h.b16 %v414
    %v984 = vunpack.c.l.b16 %v415
    %v985 = vunpack.c.l.b16 %v416
    %v986 = vunpack.c.h.b16 %v416
    %v987 = vunpack.c.l.b16 %v417
    %v988 = vunpack.c.h.b16 %v417
    %v989 = vunpack.c.l.b16 %v418
    %v990 = vunpack.c.h.b16 %v418
    %v991 = vunpack.c.l.b16 %v419
    %v992 = vunpack.c.l.b16 %v420
    %v993 = vunpack.c.h.b16 %v420
    %v994 = vunpack.c.l.b16 %v421
    %v995 = vunpack.c.h.b16 %v421
    %v996 = vunpack.c.l.b16 %v422
    %v997 = vunpack.c.h.b16 %v422
    %v998 = vunpack.c.l.b16 %v423
    %v999 = vunpack.c.l.b16 %v424
    %v1000 = vunpack.c.h.b16 %v424
    %v1001 = vunpack.c.l.b16 %v425
    %v1002 = vunpack.c.h.b16 %v425
    %v1003 = vunpack.c.l.b16 %v426
    %v1004 = vunpack.c.h.b16 %v426
    %v1005 = vunpack.c.l.b16 %v427
    %v1006 = vunpack.c.l.b16 %v428
    %v1007 = vunpack.c.h.b16 %v428
    %v1008 = vunpack.c.l.b16 %v429
    %v1009 = vunpack.c.h.b16 %v429
    %v1010 = vunpack.c.l.b16 %v430
    %v1011 = vunpack.c.h.b16 %v430
    %v1012 = vunpack.c.l.b16 %v431
    %v1013 = vunpack.c.l.b16 %v432
    %v1014 = vunpack.c.h.b16 %v432
    %v1015 = vunpack.c.l.b16 %v433
    %v1016 = vunpack.c.h.b16 %v433
    %v1017 = vunpack.c.l.b16 %v434
    %v1018 = vunpack.c.h.b16 %v434
    %v1019 = vunpack.c.l.b16 %v435
    %v1020 = vunpack.c.l.b16 %v436
    %v1021 = vunpack.c.h.b16 %v436
    %v1022 = vunpack.c.l.b16 %v437
    %v1023 = vunpack.c.h.b16 %v437
    %v1024 = vunpack.c.l.b16 %v438
    %v1025 = vunpack.c.h.b16 %v438
    %v1026 = vunpack.c.l.b16 %v439
    %v1027 = vpack.c.b16 %v684, %v677
    %v1028 = vpack.c.b16 %v685, %v678
    %v1029 = vpack.c.b16 %v686, %v679
    %v1030 = vpack.c.b16 %v687, %v680
    %v1031 = vpack.c.b16 %v688, %v681
    %v1032 = vpack.c.b16 %v689, %v682
    %v1033 = vpack.c.b16 %v690, %v683
    %v1034 = vpack.c.b16 %v698, %v691
    %v1035 = vpack.c.b16 %v699, %v692
    %v1036 = vpack.c.b16 %v700, %v693
    %v1037 = vpack.c.b16 %v701, %v694
    %v1038 = vpack.c.b16 %v702, %v695
    %v1039 = vpack.c.b16 %v703, %v696
    %v1040 = vpack.c.b16 %v704, %v697
    %v1041 = vpack.c.b16 %v712, %v705
    %v1042 = vpack.c.b16 %v713, %v706
    %v1043 = vpack.c.b16 %v714, %v707
    %v1044 = vpack.c.b16 %v715, %v708
    %v1045 = vpack.c.b16 %v716, %v709
    %v1046 = vpack.c.b16 %v717, %v710
    %v1047 = vpack.c.b16 %v718, %v711
    %v1048 = vpack.c.b16 %v726, %v719
    %v1049 = vpack.c.b16 %v727, %v720
    %v1050 = vpack.c.b16 %v728, %v721
    %v1051 = vpack.c.b16 %v729, %v722
    %v1052 = vpack.c.b16 %v730, %v723
    %v1053 = vpack.c.b16 %v731, %v724
    %v1054 = vpack.c.b16 %v732, %v725
    %v1055 = vpack.c.b16 %v740, %v733
    %v1056 = vpack.c.b16 %v741, %v734
    %v1057 = vpack.c.b16 %v742, %v735
    %v1058 = vpack.c.b16 %v743, %v736
    %v1059 = vpack.c.b16 %v744, %v737
    %v1060 = vpack.c.b16 %v745, %v738
    %v1061 = vpack.c.b16 %v746, %v739
    %v1062 = vpack.c.b16 %v754, %v747
    %v1063 = vpack.c.b16 %v755, %v748
    %v1064 = vpack.c.b16 %v756, %v749
    %v1065 = vpack.c.b16 %v757, %v750
    %v1066 = vpack.c.b16 %v758, %v751
    %v1067 = vpack.c.b16 %v759, %v752
    %v1068 = vpack.c.b16 %v760, %v753
    %v1069 = vpack.c.b16 %v768, %v761
    %v1070 = vpack.c.b16 %v769, %v762
    %v1071 = vpack.c.b16 %v770, %v763
    %v1072 = vpack.c.b16 %v771, %v764
    %v1073 = vpack.c.b16 %v772, %v765
    %v1074 = vpack.c.b16 %v773, %v766
    %v1075 = vpack.c.b16 %v774, %v767
    %v1076 = vpack.c.b16 %v782, %v775
    %v1077 = vpack.c.b16 %v783, %v776
    %v1078 = vpack.c.b16 %v784, %v777
    %v1079 = vpack.c.b16 %v785, %v778
    %v1080 = vpack.c.b16 %v786, %v779
    %v1081 = vpack.c.b16 %v787, %v780
    %v1082 = vpack.c.b16 %v788, %v781
    %v1083 = vpack.c.b16 %v796, %v789
    %v1084 = vpack.c.b16 %v797, %v790
    %v1085 = vpack.c.b16 %v798, %v791
    %v1086 = vpack.c.b16 %v799, %v792
    %v1087 = vpack.c.b16 %v800, %v793
    %v1088 = vpack.c.b16 %v801, %v794
    %v1089 = vpack.c.b16 %v802, %v795
    %v1090 = vpack.c.b16 %v810, %v803
    %v1091 = vpack.c.b16 %v811, %v804
    %v1092 = vpack.c.b16 %v812, %v805
    %v1093 = vpack.c.b16 %v813, %v806
    %v1094 = vpack.c.b16 %v814, %v807
    %v1095 = vpack.c.b16 %v815, %v808
    %v1096 = vpack.c.b16 %v816, %v809
    %v1097 = vpack.c.b16 %v824, %v817
    %v1098 = vpack.c.b16 %v825, %v818
    %v1099 = vpack.c.b16 %v826, %v819
    %v1100 = vpack.c.b16 %v827, %v820
    %v1101 = vpack.c.b16 %v828, %v821
    %v1102 = vpack.c.b16 %v829, %v822
    %v1103 = vpack.c.b16 %v830, %v823
    %v1104 = vpack.c.b16 %v838, %v831
    %v1105 = vpack.c.b16 %v839, %v832
    %v1106 = vpack.c.b16 %v840, %v833
    %v1107 = vpack.c.b16 %v841, %v834
    %v1108 = vpack.c.b16 %v842, %v835
    %v1109 = vpack.c.b16 %v843, %v836
    %v1110 = vpack.c.b16 %v844, %v837
    %v1111 = vpack.c.b16 %v852, %v845
    %v1112 = vpack.c.b16 %v853, %v846
    %v1113 = vpack.c.b16 %v854, %v847
    %v1114 = vpack.c.b16 %v855, %v848
    %v1115 = vpack.c.b16 %v856, %v849
    %v1116 = vpack.c.b16 %v857, %v850
    %v1117 = vpack.c.b16 %v858, %v851
    %v1118 = vpack.c.b16 %v866, %v859
    %v1119 = vpack.c.b16 %v867, %v860
    %v1120 = vpack.c.b16 %v868, %v861
    %v1121 = vpack.c.b16 %v869, %v862
    %v1122 = vpack.c.b16 %v870, %v863
    %v1123 = vpack.c.b16 %v871, %v864
    %v1124 = vpack.c.b16 %v872, %v865
    %v1125 = vpack.c.b16 %v880, %v873
    %v1126 = vpack.c.b16 %v881, %v874
    %v1127 = vpack.c.b16 %v882, %v875
    %v1128 = vpack.c.b16 %v883, %v876
    %v1129 = vpack.c.b16 %v884, %v877
    %v1130 = vpack.c.b16 %v885, %v878
    %v1131 = vpack.c.b16 %v886, %v879
    %v1132 = vpack.c.b16 %v894, %v887
    %v1133 = vpack.c.b16 %v895, %v888
    %v1134 = vpack.c.b16 %v896, %v889
    %v1135 = vpack.c.b16 %v897, %v890
    %v1136 = vpack.c.b16 %v898, %v891
    %v1137 = vpack.c.b16 %v899, %v892
    %v1138 = vpack.c.b16 %v900, %v893
    %v1139 = vpack.c.b16 %v908, %v901
    %v1140 = vpack.c.b16 %v909, %v902
    %v1141 = vpack.c.b16 %v910, %v903
    %v1142 = vpack.c.b16 %v911, %v904
    %v1143 = vpack.c.b16 %v912, %v905
    %v1144 = vpack.c.b16 %v913, %v906
    %v1145 = vpack.c.b16 %v914, %v907
    %v1146 = vpack.c.b16 %v922, %v915
    %v1147 = vpack.c.b16 %v923, %v916
    %v1148 = vpack.c.b16 %v924, %v917
    %v1149 = vpack.c.b16 %v925, %v918
    %v1150 = vpack.c.b16 %v926, %v919
    %v1151 = vpack.c.b16 %v927, %v920
    %v1152 = vpack.c.b16 %v928, %v921
    %v1153 = vpack.c.b16 %v936, %v929
    %v1154 = vpack.c.b16 %v937, %v930
    %v1155 = vpack.c.b16 %v938, %v931
    %v1156 = vpack.c.b16 %v939, %v932
    %v1157 = vpack.c.b16 %v940, %v933
    %v1158 = vpack.c.b16 %v941, %v934
    %v1159 = vpack.c.b16 %v942, %v935
    %v1160 = vpack.c.b16 %v950, %v943
    %v1161 = vpack.c.b16 %v951, %v944
    %v1162 = vpack.c.b16 %v952, %v945
    %v1163 = vpack.c.b16 %v953, %v946
    %v1164 = vpack.c.b16 %v954, %v947
    %v1165 = vpack.c.b16 %v955, %v948
    %v1166 = vpack.c.b16 %v956, %v949
    %v1167 = vpack.c.b16 %v964, %v957
    %v1168 = vpack.c.b16 %v965, %v958
    %v1169 = vpack.c.b16 %v966, %v959
    %v1170 = vpack.c.b16 %v967, %v960
    %v1171 = vpack.c.b16 %v968, %v961
    %v1172 = vpack.c.b16 %v969, %v962
    %v1173 = vpack.c.b16 %v970, %v963
    %v1174 = vpack.c.b16 %v978, %v971
    %v1175 = vpack.c.b16 %v979, %v972
    %v1176 = vpack.c.b16 %v980, %v973
    %v1177 = vpack.c.b16 %v981, %v974
    %v1178 = vpack.c.b16 %v982, %v975
    %v1179 = vpack.c.b16 %v983, %v976
    %v1180 = vpack.c.b16 %v984, %v977
    %v1181 = vpack.c.b16 %v992, %v985
    %v1182 = vpack.c.b16 %v993, %v986
    %v1183 = vpack.c.b16 %v994, %v987
    %v1184 = vpack.c.b16 %v995, %v988
    %v1185 = vpack.c.b16 %v996, %v989
    %v1186 = vpack.c.b16 %v997, %v990
    %v1187 = vpack.c.b16 %v998, %v991
    %v1188 = vpack.c.b16 %v1006, %v999
    %v1189 = vpack.c.b16 %v1007, %v1000
    %v1190 = vpack.c.b16 %v1008, %v1001
    %v1191 = vpack.c.b16 %v1009, %v1002
    %v1192 = vpack.c.b16 %v1010, %v1003
    %v1193 = vpack.c.b16 %v1011, %v1004
    %v1194 = vpack.c.b16 %v1012, %v1005
    %v1195 = vpack.c.b16 %v1020, %v1013
    %v1196 = vpack.c.b16 %v1021, %v1014
    %v1197 = vpack.c.b16 %v1022, %v1015
    %v1198 = vpack.c.b16 %v1023, %v1016
    %v1199 = vpack.c.b16 %v1024, %v1017
    %v1200 = vpack.c.b16 %v1025, %v1018
    %v1201 = vpack.c.b16 %v1026, %v1019
    %vm1377 = vcmask 130048
    %v1379 = vsel %vm1377, %v239, 0
    %1381 = vmatprep.subr.bf16.mxu0 %v1028
    %1382 = vmatpush1.bf16.msra.mxu0 %v1027
    %1383 = vmatprep.subr.bf16.mxu0 %v1035
    %1384 = vmatpush1.bf16.msra.mxu0 %v1034
    %1385 = vmatprep.subr.bf16.mxu0 %v1042
    %1386 = vmatpush1.bf16.msra.mxu0 %v1041
    %1387 = vmatprep.subr.bf16.mxu0 %v1049
    %1388 = vmatpush1.bf16.msra.mxu0 %v1048
    %1389 = vmatprep.subr.bf16.mxu0 %v1056
    %1390 = vmatpush1.bf16.msra.mxu0 %v1055
    %1391 = vmatprep.subr.bf16.mxu0 %v1063
    %1392 = vmatpush1.bf16.msra.mxu0 %v1062
    %1393 = vmatprep.subr.bf16.mxu0 %v1070
    %1394 = vmatpush1.bf16.msra.mxu0 %v1069
    %1395 = vmatprep.subr.bf16.mxu0 %v1077
    %1396 = vmatpush1.bf16.msra.mxu0 %v1076
    %1397 = vmatprep.subr.bf16.mxu0 %v1084
    %1398 = vmatpush1.bf16.msra.mxu0 %v1083
    %1399 = vmatprep.subr.bf16.mxu0 %v1091
    %1400 = vmatpush1.bf16.msra.mxu0 %v1090
    %1401 = vmatprep.subr.bf16.mxu0 %v1098
    %1402 = vmatpush1.bf16.msra.mxu0 %v1097
    %1403 = vmatprep.subr.bf16.mxu0 %v1105
    %1404 = vmatpush1.bf16.msra.mxu0 %v1104
    %1405 = vmatprep.subr.bf16.mxu0 %v1112
    %1406 = vmatpush1.bf16.msra.mxu0 %v1111
    %1407 = vmatprep.subr.bf16.mxu0 %v1119
    %1408 = vmatpush1.bf16.msra.mxu0 %v1118
    %1409 = vmatprep.subr.bf16.mxu0 %v1126
    %1410 = vmatpush1.bf16.msra.mxu0 %v1125
    %1411 = vmatprep.subr.bf16.mxu0 %v1133
    %1412 = vmatpush1.bf16.msra.mxu0 %v1132
    %1413 = vmatprep.mubr.bf16.mxu0 %v237
    %1414 = vmatmul.mubr.bf16.gmra.mrb[0].mxu0 %v236
    %v1415 = vpop.f32.mrb[0].mxu0
    %v1416 = vadd.f32 %v445, %v1415
    %v1417 = vpop.f32.mrb[0].mxu0
    %v1418 = vadd.f32 %v449, %v1417
    %v1419 = vpop.f32.mrb[0].mxu0
    %v1420 = vpop.f32.mrb[0].mxu0
    %1421 = vdwg.mxu0
    %1422 = vmatprep.subr.bf16.mxu0 %v1140
    %1423 = vmatpush1.bf16.msra.mxu0 %v1139
    %1424 = vmatprep.subr.bf16.mxu0 %v1147
    %1425 = vmatpush1.bf16.msra.mxu0 %v1146
    %1426 = vmatprep.subr.bf16.mxu0 %v1154
    %1427 = vmatpush1.bf16.msra.mxu0 %v1153
    %1428 = vmatprep.subr.bf16.mxu0 %v1161
    %1429 = vmatpush1.bf16.msra.mxu0 %v1160
    %1430 = vmatprep.subr.bf16.mxu0 %v1168
    %1431 = vmatpush1.bf16.msra.mxu0 %v1167
    %1432 = vmatprep.subr.bf16.mxu0 %v1175
    %1433 = vmatpush1.bf16.msra.mxu0 %v1174
    %1434 = vmatprep.subr.bf16.mxu0 %v1182
    %1435 = vmatpush1.bf16.msra.mxu0 %v1181
    %1436 = vmatprep.subr.bf16.mxu0 %v1189
    %1437 = vmatpush1.bf16.msra.mxu0 %v1188
    %1438 = vmatprep.subr.bf16.mxu0 %v1196
    %1439 = vmatpush1.bf16.msra.mxu0 %v1195
    %1440 = vmatprep.subr.bf16.mxu0 0
    %1441 = vmatpush1.bf16.msra.mxu0 0
    %1442 = vmatprep.subr.bf16.mxu0 0
    %1443 = vmatpush1.bf16.msra.mxu0 0
    %1444 = vmatprep.subr.bf16.mxu0 0
    %1445 = vmatpush1.bf16.msra.mxu0 0
    %1446 = vmatprep.subr.bf16.mxu0 0
    %1447 = vmatpush1.bf16.msra.mxu0 0
    %1448 = vmatprep.subr.bf16.mxu0 0
    %1449 = vmatpush1.bf16.msra.mxu0 0
    %1450 = vmatprep.subr.bf16.mxu0 0
    %1451 = vmatpush1.bf16.msra.mxu0 0
    %1452 = vmatprep.subr.bf16.mxu0 0
    %1453 = vmatpush1.bf16.msra.mxu0 0
    %1454 = vmatprep.mubr.bf16.mxu0 %v1379
    %1455 = vmatmul.mubr.bf16.gmra.mrb[0].mxu0 %v238
    %v1456 = vpop.f32.mrb[0].mxu0
    %v1457 = vadd.f32 %v1416, %v1456
    %v1458 = vpop.f32.mrb[0].mxu0
    %v1459 = vadd.f32 %v1418, %v1458
    %v1460 = vpop.f32.mrb[0].mxu0
    %v1461 = vpop.f32.mrb[0].mxu0
    %1462 = vdwg.mxu0
    %1463 = vmatprep.subr.bf16.mxu0 %v1030
    %1464 = vmatpush1.bf16.msra.mxu0 %v1029
    %1465 = vmatprep.subr.bf16.mxu0 %v1037
    %1466 = vmatpush1.bf16.msra.mxu0 %v1036
    %1467 = vmatprep.subr.bf16.mxu0 %v1044
    %1468 = vmatpush1.bf16.msra.mxu0 %v1043
    %1469 = vmatprep.subr.bf16.mxu0 %v1051
    %1470 = vmatpush1.bf16.msra.mxu0 %v1050
    %1471 = vmatprep.subr.bf16.mxu0 %v1058
    %1472 = vmatpush1.bf16.msra.mxu0 %v1057
    %1473 = vmatprep.subr.bf16.mxu0 %v1065
    %1474 = vmatpush1.bf16.msra.mxu0 %v1064
    %1475 = vmatprep.subr.bf16.mxu0 %v1072
    %1476 = vmatpush1.bf16.msra.mxu0 %v1071
    %1477 = vmatprep.subr.bf16.mxu0 %v1079
    %1478 = vmatpush1.bf16.msra.mxu0 %v1078
    %1479 = vmatprep.subr.bf16.mxu0 %v1086
    %1480 = vmatpush1.bf16.msra.mxu0 %v1085
    %1481 = vmatprep.subr.bf16.mxu0 %v1093
    %1482 = vmatpush1.bf16.msra.mxu0 %v1092
    %1483 = vmatprep.subr.bf16.mxu0 %v1100
    %1484 = vmatpush1.bf16.msra.mxu0 %v1099
    %1485 = vmatprep.subr.bf16.mxu0 %v1107
    %1486 = vmatpush1.bf16.msra.mxu0 %v1106
    %1487 = vmatprep.subr.bf16.mxu0 %v1114
    %1488 = vmatpush1.bf16.msra.mxu0 %v1113
    %1489 = vmatprep.subr.bf16.mxu0 %v1121
    %1490 = vmatpush1.bf16.msra.mxu0 %v1120
    %1491 = vmatprep.subr.bf16.mxu0 %v1128
    %1492 = vmatpush1.bf16.msra.mxu0 %v1127
    %1493 = vmatprep.subr.bf16.mxu0 %v1135
    %1494 = vmatpush1.bf16.msra.mxu0 %v1134
    %1495 = vmatprep.mubr.bf16.mxu0 %v237
    %1496 = vmatmul.mubr.bf16.gmra.mrb[0].mxu0 %v236
    %v1497 = vpop.f32.mrb[0].mxu0
    %v1498 = vadd.f32 %v453, %v1497
    %v1499 = vpop.f32.mrb[0].mxu0
    %v1500 = vadd.f32 %v457, %v1499
    %v1501 = vpop.f32.mrb[0].mxu0
    %v1502 = vpop.f32.mrb[0].mxu0
    %1503 = vdwg.mxu0
    %1504 = vmatprep.subr.bf16.mxu0 %v1142
    %1505 = vmatpush1.bf16.msra.mxu0 %v1141
    %1506 = vmatprep.subr.bf16.mxu0 %v1149
    %1507 = vmatpush1.bf16.msra.mxu0 %v1148
    %1508 = vmatprep.subr.bf16.mxu0 %v1156
    %1509 = vmatpush1.bf16.msra.mxu0 %v1155
    %1510 = vmatprep.subr.bf16.mxu0 %v1163
    %1511 = vmatpush1.bf16.msra.mxu0 %v1162
    %1512 = vmatprep.subr.bf16.mxu0 %v1170
    %1513 = vmatpush1.bf16.msra.mxu0 %v1169
    %1514 = vmatprep.subr.bf16.mxu0 %v1177
    %1515 = vmatpush1.bf16.msra.mxu0 %v1176
    %1516 = vmatprep.subr.bf16.mxu0 %v1184
    %1517 = vmatpush1.bf16.msra.mxu0 %v1183
    %1518 = vmatprep.subr.bf16.mxu0 %v1191
    %1519 = vmatpush1.bf16.msra.mxu0 %v1190
    %1520 = vmatprep.subr.bf16.mxu0 %v1198
    %1521 = vmatpush1.bf16.msra.mxu0 %v1197
    %1522 = vmatprep.subr.bf16.mxu0 0
    %1523 = vmatpush1.bf16.msra.mxu0 0
    %1524 = vmatprep.subr.bf16.mxu0 0
    %1525 = vmatpush1.bf16.msra.mxu0 0
    %1526 = vmatprep.subr.bf16.mxu0 0
    %1527 = vmatpush1.bf16.msra.mxu0 0
    %1528 = vmatprep.subr.bf16.mxu0 0
    %1529 = vmatpush1.bf16.msra.mxu0 0
    %1530 = vmatprep.subr.bf16.mxu0 0
    %1531 = vmatpush1.bf16.msra.mxu0 0
    %1532 = vmatprep.subr.bf16.mxu0 0
    %1533 = vmatpush1.bf16.msra.mxu0 0
    %1534 = vmatprep.subr.bf16.mxu0 0
    %1535 = vmatpush1.bf16.msra.mxu0 0
    %1536 = vmatprep.mubr.bf16.mxu0 %v1379
    %1537 = vmatmul.mubr.bf16.gmra.mrb[0].mxu0 %v238
    %v1538 = vpop.f32.mrb[0].mxu0
    %v1539 = vadd.f32 %v1498, %v1538
    %v1540 = vpop.f32.mrb[0].mxu0
    %v1541 = vadd.f32 %v1500, %v1540
    %v1542 = vpop.f32.mrb[0].mxu0
    %v1543 = vpop.f32.mrb[0].mxu0
    %1544 = vdwg.mxu0
    %1545 = vmatprep.subr.bf16.mxu0 %v1032
    %1546 = vmatpush1.bf16.msra.mxu0 %v1031
    %1547 = vmatprep.subr.bf16.mxu0 %v1039
    %1548 = vmatpush1.bf16.msra.mxu0 %v1038
    %1549 = vmatprep.subr.bf16.mxu0 %v1046
    %1550 = vmatpush1.bf16.msra.mxu0 %v1045
    %1551 = vmatprep.subr.bf16.mxu0 %v1053
    %1552 = vmatpush1.bf16.msra.mxu0 %v1052
    %1553 = vmatprep.subr.bf16.mxu0 %v1060
    %1554 = vmatpush1.bf16.msra.mxu0 %v1059
    %1555 = vmatprep.subr.bf16.mxu0 %v1067
    %1556 = vmatpush1.bf16.msra.mxu0 %v1066
    %1557 = vmatprep.subr.bf16.mxu0 %v1074
    %1558 = vmatpush1.bf16.msra.mxu0 %v1073
    %1559 = vmatprep.subr.bf16.mxu0 %v1081
    %1560 = vmatpush1.bf16.msra.mxu0 %v1080
    %1561 = vmatprep.subr.bf16.mxu0 %v1088
    %1562 = vmatpush1.bf16.msra.mxu0 %v1087
    %1563 = vmatprep.subr.bf16.mxu0 %v1095
    %1564 = vmatpush1.bf16.msra.mxu0 %v1094
    %1565 = vmatprep.subr.bf16.mxu0 %v1102
    %1566 = vmatpush1.bf16.msra.mxu0 %v1101
    %1567 = vmatprep.subr.bf16.mxu0 %v1109
    %1568 = vmatpush1.bf16.msra.mxu0 %v1108
    %1569 = vmatprep.subr.bf16.mxu0 %v1116
    %1570 = vmatpush1.bf16.msra.mxu0 %v1115
    %1571 = vmatprep.subr.bf16.mxu0 %v1123
    %1572 = vmatpush1.bf16.msra.mxu0 %v1122
    %1573 = vmatprep.subr.bf16.mxu0 %v1130
    %1574 = vmatpush1.bf16.msra.mxu0 %v1129
    %1575 = vmatprep.subr.bf16.mxu0 %v1137
    %1576 = vmatpush1.bf16.msra.mxu0 %v1136
    %1577 = vmatprep.mubr.bf16.mxu0 %v237
    %1578 = vmatmul.mubr.bf16.gmra.mrb[0].mxu0 %v236
    %v1579 = vpop.f32.mrb[0].mxu0
    %v1580 = vadd.f32 %v461, %v1579
    %v1581 = vpop.f32.mrb[0].mxu0
    %v1582 = vadd.f32 %v465, %v1581
    %v1583 = vpop.f32.mrb[0].mxu0
    %v1584 = vpop.f32.mrb[0].mxu0
    %1585 = vdwg.mxu0
    %1586 = vmatprep.subr.bf16.mxu0 %v1144
    %1587 = vmatpush1.bf16.msra.mxu0 %v1143
    %1588 = vmatprep.subr.bf16.mxu0 %v1151
    %1589 = vmatpush1.bf16.msra.mxu0 %v1150
    %1590 = vmatprep.subr.bf16.mxu0 %v1158
    %1591 = vmatpush1.bf16.msra.mxu0 %v1157
    %1592 = vmatprep.subr.bf16.mxu0 %v1165
    %1593 = vmatpush1.bf16.msra.mxu0 %v1164
    %1594 = vmatprep.subr.bf16.mxu0 %v1172
    %1595 = vmatpush1.bf16.msra.mxu0 %v1171
    %1596 = vmatprep.subr.bf16.mxu0 %v1179
    %1597 = vmatpush1.bf16.msra.mxu0 %v1178
    %1598 = vmatprep.subr.bf16.mxu0 %v1186
    %1599 = vmatpush1.bf16.msra.mxu0 %v1185
    %1600 = vmatprep.subr.bf16.mxu0 %v1193
    %1601 = vmatpush1.bf16.msra.mxu0 %v1192
    %1602 = vmatprep.subr.bf16.mxu0 %v1200
    %1603 = vmatpush1.bf16.msra.mxu0 %v1199
    %1604 = vmatprep.subr.bf16.mxu0 0
    %1605 = vmatpush1.bf16.msra.mxu0 0
    %1606 = vmatprep.subr.bf16.mxu0 0
    %1607 = vmatpush1.bf16.msra.mxu0 0
    %1608 = vmatprep.subr.bf16.mxu0 0
    %1609 = vmatpush1.bf16.msra.mxu0 0
    %1610 = vmatprep.subr.bf16.mxu0 0
    %1611 = vmatpush1.bf16.msra.mxu0 0
    %1612 = vmatprep.subr.bf16.mxu0 0
    %1613 = vmatpush1.bf16.msra.mxu0 0
    %1614 = vmatprep.subr.bf16.mxu0 0
    %1615 = vmatpush1.bf16.msra.mxu0 0
    %1616 = vmatprep.subr.bf16.mxu0 0
    %1617 = vmatpush1.bf16.msra.mxu0 0
    %1618 = vmatprep.mubr.bf16.mxu0 %v1379
    %1619 = vmatmul.mubr.bf16.gmra.mrb[0].mxu0 %v238
    %v1620 = vpop.f32.mrb[0].mxu0
    %v1621 = vadd.f32 %v1580, %v1620
    %v1622 = vpop.f32.mrb[0].mxu0
    %v1623 = vadd.f32 %v1582, %v1622
    %v1624 = vpop.f32.mrb[0].mxu0
    %v1625 = vpop.f32.mrb[0].mxu0
    %1626 = vdwg.mxu0
    %1627 = vmatprep.subr.bf16.mxu0 0
    %1628 = vmatpush1.bf16.msra.mxu0 %v1033
    %1629 = vmatprep.subr.bf16.mxu0 0
    %1630 = vmatpush1.bf16.msra.mxu0 %v1040
    %1631 = vmatprep.subr.bf16.mxu0 0
    %1632 = vmatpush1.bf16.msra.mxu0 %v1047
    %1633 = vmatprep.subr.bf16.mxu0 0
    %1634 = vmatpush1.bf16.msra.mxu0 %v1054
    %1635 = vmatprep.subr.bf16.mxu0 0
    %1636 = vmatpush1.bf16.msra.mxu0 %v1061
    %1637 = vmatprep.subr.bf16.mxu0 0
    %1638 = vmatpush1.bf16.msra.mxu0 %v1068
    %1639 = vmatprep.subr.bf16.mxu0 0
    %1640 = vmatpush1.bf16.msra.mxu0 %v1075
    %1641 = vmatprep.subr.bf16.mxu0 0
    %1642 = vmatpush1.bf16.msra.mxu0 %v1082
    %1643 = vmatprep.subr.bf16.mxu0 0
    %1644 = vmatpush1.bf16.msra.mxu0 %v1089
    %1645 = vmatprep.subr.bf16.mxu0 0
    %1646 = vmatpush1.bf16.msra.mxu0 %v1096
    %1647 = vmatprep.subr.bf16.mxu0 0
    %1648 = vmatpush1.bf16.msra.mxu0 %v1103
    %1649 = vmatprep.subr.bf16.mxu0 0
    %1650 = vmatpush1.bf16.msra.mxu0 %v1110
    %1651 = vmatprep.subr.bf16.mxu0 0
    %1652 = vmatpush1.bf16.msra.mxu0 %v1117
    %1653 = vmatprep.subr.bf16.mxu0 0
    %1654 = vmatpush1.bf16.msra.mxu0 %v1124
    %1655 = vmatprep.subr.bf16.mxu0 0
    %1656 = vmatpush1.bf16.msra.mxu0 %v1131
    %1657 = vmatprep.subr.bf16.mxu0 0
    %1658 = vmatpush1.bf16.msra.mxu0 %v1138
    %1659 = vmatprep.mubr.bf16.mxu0 %v237
    %1660 = vmatmul.mubr.bf16.gmra.mrb[0].mxu0 %v236
    %v1661 = vpop.f32.mrb[0].mxu0
    %v1662 = vadd.f32 %v469, %v1661
    %v1663 = vpop.f32.mrb[0].mxu0
    %v1664 = vpop.f32.mrb[0].mxu0
    %v1665 = vpop.f32.mrb[0].mxu0
    %1666 = vdwg.mxu0
    %1667 = vmatprep.subr.bf16.mxu0 0
    %1668 = vmatpush1.bf16.msra.mxu0 %v1145
    %1669 = vmatprep.subr.bf16.mxu0 0
    %1670 = vmatpush1.bf16.msra.mxu0 %v1152
    %1671 = vmatprep.subr.bf16.mxu0 0
    %1672 = vmatpush1.bf16.msra.mxu0 %v1159
    %1673 = vmatprep.subr.bf16.mxu0 0
    %1674 = vmatpush1.bf16.msra.mxu0 %v1166
    %1675 = vmatprep.subr.bf16.mxu0 0
    %1676 = vmatpush1.bf16.msra.mxu0 %v1173
    %1677 = vmatprep.subr.bf16.mxu0 0
    %1678 = vmatpush1.bf16.msra.mxu0 %v1180
    %1679 = vmatprep.subr.bf16.mxu0 0
    %1680 = vmatpush1.bf16.msra.mxu0 %v1187
    %1681 = vmatprep.subr.bf16.mxu0 0
    %1682 = vmatpush1.bf16.msra.mxu0 %v1194
    %1683 = vmatprep.subr.bf16.mxu0 0
    %1684 = vmatpush1.bf16.msra.mxu0 %v1201
    %1685 = vmatprep.subr.bf16.mxu0 0
    %1686 = vmatpush1.bf16.msra.mxu0 0
    %1687 = vmatprep.subr.bf16.mxu0 0
    %1688 = vmatpush1.bf16.msra.mxu0 0
    %1689 = vmatprep.subr.bf16.mxu0 0
    %1690 = vmatpush1.bf16.msra.mxu0 0
    %1691 = vmatprep.subr.bf16.mxu0 0
    %1692 = vmatpush1.bf16.msra.mxu0 0
    %1693 = vmatprep.subr.bf16.mxu0 0
    %1694 = vmatpush1.bf16.msra.mxu0 0
    %1695 = vmatprep.subr.bf16.mxu0 0
    %1696 = vmatpush1.bf16.msra.mxu0 0
    %1697 = vmatprep.subr.bf16.mxu0 0
    %1698 = vmatpush1.bf16.msra.mxu0 0
    %1699 = vmatprep.mubr.bf16.mxu0 %v1379
    %1700 = vmatmul.mubr.bf16.gmra.mrb[0].mxu0 %v238
    %v1701 = vpop.f32.mrb[0].mxu0
    %v1702 = vadd.f32 %v1662, %v1701
    %v1703 = vpop.f32.mrb[0].mxu0
    %v1704 = vpop.f32.mrb[0].mxu0
    %v1705 = vpop.f32.mrb[0].mxu0
    %1706 = vdwg.mxu0
    %v1707 = vsub.f32 0.0, %v1457
    %v1708 = vsub.f32 0.0, %v1459
    %v1709 = vsub.f32 0.0, %v1539
    %v1710 = vsub.f32 0.0, %v1541
    %v1711 = vsub.f32 0.0, %v1621
    %v1712 = vsub.f32 0.0, %v1623
    %v1713 = vsub.f32 0.0, %v1702
    %v1714 = vmul.f32 %v1707, 1.442695
    %v1715 = vpow.pop %v1714
    %v1716 = vmul.f32 %v1708, 1.442695
    %v1717 = vpow.pop %v1716
    %v1718 = vmul.f32 %v1709, 1.442695
    %v1719 = vpow.pop %v1718
    %v1720 = vmul.f32 %v1710, 1.442695
    %v1721 = vpow.pop %v1720
    %v1722 = vmul.f32 %v1711, 1.442695
    %v1723 = vpow.pop %v1722
    %v1724 = vmul.f32 %v1712, 1.442695
    %v1725 = vpow.pop %v1724
    %v1726 = vmul.f32 %v1713, 1.442695
    %v1727 = vpow.pop %v1726
    %v1728 = vadd.f32 %v1715, 1.0
    %v1729 = vadd.f32 %v1717, 1.0
    %v1730 = vadd.f32 %v1719, 1.0
    %v1731 = vadd.f32 %v1721, 1.0
    %v1732 = vadd.f32 %v1723, 1.0
    %v1733 = vadd.f32 %v1725, 1.0
    %v1734 = vadd.f32 %v1727, 1.0
    %v1735 = vrcp.pop %v1728
    %v1736 = vrcp.pop %v1729
    %v1737 = vrcp.pop %v1730
    %v1738 = vrcp.pop %v1731
    %v1739 = vrcp.pop %v1732
    %v1740 = vrcp.pop %v1733
    %v1741 = vrcp.pop %v1734
    %1742 = vst [vmem:[#allocation10] sm:$0xff] %v1735
    %1743 = vst [vmem:[#allocation10 + $0x8] sm:$0xff] %v1736
    %1744 = vst [vmem:[#allocation10 + $0x10] sm:$0xff] %v1737
    %1745 = vst [vmem:[#allocation10 + $0x18] sm:$0xff] %v1738
    %1746 = vst [vmem:[#allocation10 + $0x20] sm:$0xff] %v1739
    %1747 = vst [vmem:[#allocation10 + $0x28] sm:$0xff] %v1740
    %1748 = vst.msk [vmem:[#allocation10 + $0x30] sm:$0xff] %vm1377, %v1741
    // Predicated region
    $region38: #{_decoder_forward.1} parent=1 // pred_check
      _
    $region39: #{_decoder_forward.1} parent=1 // pred_check_branch
      %1750 = sbr.rel (0) target = $region41
    $region40: #{_decoder_forward.1} parent=1 // pred_region
      %s1752 = ssub.s32 896, 896
      %1753 = vsyncadd [#allocation4], %s1752
      %s1755 = sshll.u32 [#allocation10], 4
      %s1756 = int_to_ptr.vmem [resolvable:$true] %s1755
      %1758 = dma.vmem_to_hbm [thread:$0]  %s1756, 896, %s5, [#allocation4]
    $region41: #{_decoder_forward.1} parent=1 // pred_fallthru
      _
    // Predicated region
    $region42: #{_decoder_forward.1} parent=1 // pred_check
      _
    $region43: #{_decoder_forward.1} parent=1 // pred_check_branch
      %1760 = sbr.rel (0) target = $region45
    $region44: #{_decoder_forward.1} parent=1 // pred_region
      %1761 = dma.done [#allocation4], 896
    $region45: #{_decoder_forward.1} parent=1 // pred_fallthru
      _
    %1762 = vsyncpa [#allocation3], 1
    %1763 = vsyncpa [#allocation6], 1
    %1764 = vsyncpa [#allocation9], 1
    %1765 = vsyncpa [#allocation4], 1

</llo_original>
